<compile_context>
chip_gen: v7x
topology: tpu7x:2x2x1
jax: 0.10.0
libtpu: 0.0.40
codegen_flags: <defaults>
</compile_context>

<pallas_src>
import functools

import jax
import jax.numpy as jnp
from jax.experimental import pallas as pl
from jax.experimental.pallas import tpu as pltpu


def cnn_kernel(xb_ref, w1_ref, b1_ref, w2_ref, b2_ref, out_ref, *, K, pool):
    # xb_ref : (C_in, WIN, TB, NW)   VMEM  unfolded input, NW lane-dense, WIN = pool + K - 1
    # w1_ref : (out_ch * C_in * K,)  SMEM  conv weights (flat, scalar reads)
    # b1_ref : (out_ch,)             SMEM  conv bias
    # w2_ref : (ncls, out_ch, NW)    VMEM  Linear weight, w2[j, o, p] = fc_w[j, o*NW + p]
    # b2_ref : (ncls,)               SMEM  Linear bias (scalar reads)
    # out_ref: (TB, ncls)            VMEM
    C_in, WIN, TB, NW = xb_ref.shape
    out_ch = b1_ref.shape[0]
    ncls = out_ref.shape[-1]
    f32 = jnp.float32

    # --- Conv1d + MaxPool1d fused ---------------------------------------------
    # For each pool position p, the conv output is a sum of K aligned (TB, NW)
    # tap slabs scaled by scalar weights (pure VPU, no relayouts).  The pool is
    # folded immediately into two interleaved running maxima per output channel
    # (pairwise tree: serial maximum depth ~pool/2, 2*out_ch independent chains).
    pmax = [[None, None] for _ in range(out_ch)]
    for p in range(pool):
        taps = [[xb_ref[c, p + dk].astype(f32) for dk in range(K)]
                for c in range(C_in)]                               # C_in*K x (TB, NW)
        b = p & 1
        for o in range(out_ch):
            s = None
            for c in range(C_in):
                base = (o * C_in + c) * K
                for dk in range(K):
                    term = taps[c][dk] * w1_ref[base + dk]
                    s = term if s is None else s + term
            pmax[o][b] = s if pmax[o][b] is None else jnp.maximum(pmax[o][b], s)

    # --- bias + ReLU + Linear ---------------------------------------------------
    # Conv bias is added post-pool (max(x)+b == max(x+b)); the Linear is folded
    # in as VPU multiply-accumulate over lane-dense (TB, NW) slabs, then one
    # cross-lane reduce per class.  fc rows are loaded once per (class, channel).
    w2rows = [[w2_ref[j, o:o + 1, :].astype(f32) for o in range(out_ch)]
              for j in range(ncls)]                                  # ncls*out_ch x (1, NW)
    lin = [None] * ncls                                              # each (TB, NW)
    for o in range(out_ch):
        if pmax[o][1] is None:
            pooled = pmax[o][0]
        else:
            pooled = jnp.maximum(pmax[o][0], pmax[o][1])             # (TB, NW)
        pooled = jnp.maximum(pooled + b1_ref[o], 0.0)                # bias + ReLU
        for j in range(ncls):
            contrib = pooled * w2rows[j][o]                          # (TB, NW)
            lin[j] = contrib if lin[j] is None else lin[j] + contrib

    cols = [jnp.sum(lin[j], axis=-1, keepdims=True) + b2_ref[j]
            for j in range(ncls)]                                    # ncls x (TB, 1)
    out_ref[...] = jnp.concatenate(cols, axis=-1).astype(out_ref.dtype)


def cnn_pallas(x, conv_w, conv_b, fc_w, fc_b, *, batch_tile=None,
               input_dtype=jnp.float32):
    """x: (B, C_in, L) float32; conv_w: (5, C_in, 3); conv_b: (5,);
    fc_w: (2, 5*(L//10)); fc_b: (2,).

    input_dtype: storage dtype for the unfolded input / fc weight (accumulation
    is always f32).  Pass jnp.bfloat16 on v6e/v7x to halve DMA bytes; keep the
    f32 default on v5e.
    """
    B, C_in, L = x.shape
    K, pool = 3, 10
    assert L % pool == 0
    NW = L // pool                       # 150
    WIN = pool + K - 1                   # 12
    out_ch = conv_w.shape[0]             # 5
    ncls = fc_w.shape[0]                 # 2

    # Batch tiling: for B >= 16 default to >= 2 grid steps so the "parallel"
    # grid axis can be sharded across v7x's two TensorCores.  Blocks stay far
    # below every generation's scoped-VMEM default (xb block = 7.2 KB per row).
    if batch_tile is None:
        if B >= 16 and B % 16 == 0:
            batch_tile = B // 2
            while batch_tile > 1024 and batch_tile % 2 == 0 and (batch_tile // 2) % 8 == 0:
                batch_tile //= 2
        else:
            batch_tile = B
    assert B % batch_tile == 0
    # sublane rule on the (TB, NW) / (TB, ncls) blocks
    assert batch_tile == B or batch_tile % 8 == 0

    # ---- host-side glue: pad + strided-slice unfold ---------------------------
    # xb[c, t, b, w] = x_pad[b, c, t + pool*w]; built from WIN strided slices
    # (stride = pool) instead of an advanced-index gather.
    x_pad = jnp.pad(x.astype(input_dtype), ((0, 0), (0, 0), (1, 1)))   # (B, C_in, L+2)
    lim = pool * (NW - 1) + 1
    taps = [jax.lax.slice(x_pad, (0, 0, dk), (B, C_in, dk + lim), (1, 1, pool))
            for dk in range(WIN)]                                       # WIN x (B, C_in, NW)
    xb = jnp.transpose(jnp.stack(taps, axis=0), (2, 0, 1, 3))           # (C_in, WIN, B, NW)

    w1_flat = conv_w.reshape(-1).astype(jnp.float32)                    # (out_ch*C_in*K,)
    b1 = conv_b.astype(jnp.float32)                                     # (out_ch,)
    # torch .view(-1, 750) flattens channel-major: col = o*NW + p
    w2 = fc_w.reshape(ncls, out_ch, NW).astype(input_dtype)             # (ncls, out_ch, NW)
    b2 = fc_b.astype(jnp.float32)                                       # (ncls,)

    itemsize = jnp.dtype(input_dtype).itemsize
    cost = pl.CostEstimate(
        flops=B * L * out_ch * C_in * 2 * K + B * L * out_ch + B * out_ch * NW * ncls * 2,
        transcendentals=0,
        bytes_accessed=xb.size * itemsize + w2.size * itemsize + B * ncls * 4,
    )

    kernel = functools.partial(cnn_kernel, K=K, pool=pool)
    return pl.pallas_call(
        kernel,
        out_shape=jax.ShapeDtypeStruct((B, ncls), jnp.float32),
        grid=(B // batch_tile,),
        in_specs=[
            pl.BlockSpec((C_in, WIN, batch_tile, NW), lambda i: (0, 0, i, 0)),  # xb
            pl.BlockSpec(memory_space=pltpu.MemorySpace.SMEM),   # conv weights (scalars)
            pl.BlockSpec(memory_space=pltpu.MemorySpace.SMEM),   # conv bias  (scalars)
            pl.BlockSpec(memory_space=pltpu.MemorySpace.VMEM),   # fc weight
            pl.BlockSpec(memory_space=pltpu.MemorySpace.SMEM),   # fc bias    (scalars)
        ],
        out_specs=pl.BlockSpec((batch_tile, ncls), lambda i: (i, 0)),
        compiler_params=pltpu.CompilerParams(
            dimension_semantics=("parallel",)),
        cost_estimate=cost,
    )(xb, w1_flat, b1, w2, b2)


def cnn_reference(x, conv_w, conv_b, fc_w, fc_b):
    """Pure-JAX reference with identical semantics to the PyTorch module."""
    B, C_in, L = x.shape
    out_ch = conv_w.shape[0]
    xp = jnp.pad(x, ((0, 0), (0, 0), (1, 1)))
    y1 = jnp.zeros((B, out_ch, L), jnp.float32)
    for k in range(3):
        y1 = y1 + jnp.einsum('bcl,oc->bol', xp[:, :, k:k + L], conv_w[:, :, k])
    y1 = y1 + conv_b[None, :, None]
    y3 = jnp.max(y1.reshape(B, out_ch, L // 10, 10), axis=-1)
    y3 = jnp.maximum(y3, 0.0)
    y4 = y3.reshape(B, out_ch * (L // 10)) @ fc_w.T + fc_b
    return y4


if __name__ == "__main__":
    # The module hard-codes H = 5 * 150, so the sequence length must be 1500
    # (MaxPool1d(10) -> 150). in_chann=1, out_classes=2, small batch.
    B, C_in, L = 2, 1, 1500
    out_ch, ncls = 5, 2

    key = jax.random.PRNGKey(0)
    kx, kw1, kb1, kw2, kb2 = jax.random.split(key, 5)
    x = jax.random.normal(kx, (B, C_in, L), dtype=jnp.float32)
    conv_w = 0.1 * jax.random.normal(kw1, (out_ch, C_in, 3), dtype=jnp.float32)
    conv_b = 0.1 * jax.random.normal(kb1, (out_ch,), dtype=jnp.float32)
    fc_w = 0.05 * jax.random.normal(kw2, (ncls, out_ch * (L // 10)), dtype=jnp.float32)
    fc_b = 0.05 * jax.random.normal(kb2, (ncls,), dtype=jnp.float32)

    out = cnn_pallas(x, conv_w, conv_b, fc_w, fc_b)
    out = jax.block_until_ready(out)

    ref = cnn_reference(x, conv_w, conv_b, fc_w, fc_b)
    assert out.shape == (B, ncls)
    assert jnp.allclose(out, ref, atol=1e-2, rtol=1e-2), (out, ref)

    print("KERNEL_OK")
</pallas_src>

<mosaic_0001>
module attributes {stable_mosaic.version = 11 : i64} {
  func.func @cnn_kernel(%arg0: i32, %arg1: memref<1x12x2x150xf32, #tpu.memory_space<vmem>>, %arg2: memref<15xf32, #tpu.memory_space<smem>>, %arg3: memref<5xf32, #tpu.memory_space<smem>>, %arg4: memref<2x5x150xf32, #tpu.memory_space<vmem>>, %arg5: memref<2xf32, #tpu.memory_space<smem>>, %arg6: memref<2x2xf32, #tpu.memory_space<vmem>>) attributes {dimension_semantics = [#tpu.dimension_semantics<parallel>], iteration_bounds = array<i64: 1>, scalar_prefetch = 0 : i64, scratch_operands = 0 : i64, tpu.core_type = #tpu.core_type<tc>, window_params = [{transform_indices = @transform_0, window_bounds = array<i64: 1, 12, 2, 150>}, {transform_indices = @transform_1, window_bounds = array<i64: 15>}, {transform_indices = @transform_2, window_bounds = array<i64: 5>}, {pipeline_mode = #tpu.pipeline_mode<synchronous>, transform_indices = @transform_3, window_bounds = array<i64: 2, 5, 150>}, {transform_indices = @transform_4, window_bounds = array<i64: 2>}, {transform_indices = @transform_5, window_bounds = array<i64: 2, 2>}]} {
    %c0 = arith.constant 0 : index
    %c0_0 = arith.constant 0 : index
    %c0_1 = arith.constant 0 : index
    %c0_2 = arith.constant 0 : index
    %0 = vector.load %arg1[%c0, %c0_0, %c0_1, %c0_2] : memref<1x12x2x150xf32, #tpu.memory_space<vmem>>, vector<1x1x2x150xf32>
    %1 = vector.shape_cast %0 : vector<1x1x2x150xf32> to vector<2x150xf32>
    %c0_3 = arith.constant 0 : index
    %c1 = arith.constant 1 : index
    %c0_4 = arith.constant 0 : index
    %c0_5 = arith.constant 0 : index
    %2 = vector.load %arg1[%c0_3, %c1, %c0_4, %c0_5] : memref<1x12x2x150xf32, #tpu.memory_space<vmem>>, vector<1x1x2x150xf32>
    %3 = vector.shape_cast %2 : vector<1x1x2x150xf32> to vector<2x150xf32>
    %c0_6 = arith.constant 0 : index
    %c2 = arith.constant 2 : index
    %c0_7 = arith.constant 0 : index
    %c0_8 = arith.constant 0 : index
    %4 = vector.load %arg1[%c0_6, %c2, %c0_7, %c0_8] : memref<1x12x2x150xf32, #tpu.memory_space<vmem>>, vector<1x1x2x150xf32>
    %5 = vector.shape_cast %4 : vector<1x1x2x150xf32> to vector<2x150xf32>
    %c0_9 = arith.constant 0 : index
    %6 = memref.load %arg2[%c0_9] : memref<15xf32, #tpu.memory_space<smem>>
    %7 = vector.broadcast %6 : f32 to vector<2x150xf32>
    %8 = arith.mulf %1, %7 : vector<2x150xf32>
    %c1_10 = arith.constant 1 : index
    %9 = memref.load %arg2[%c1_10] : memref<15xf32, #tpu.memory_space<smem>>
    %10 = vector.broadcast %9 : f32 to vector<2x150xf32>
    %11 = arith.mulf %3, %10 : vector<2x150xf32>
    %12 = arith.addf %8, %11 : vector<2x150xf32>
    %c2_11 = arith.constant 2 : index
    %13 = memref.load %arg2[%c2_11] : memref<15xf32, #tpu.memory_space<smem>>
    %14 = vector.broadcast %13 : f32 to vector<2x150xf32>
    %15 = arith.mulf %5, %14 : vector<2x150xf32>
    %16 = arith.addf %12, %15 : vector<2x150xf32>
    %c3 = arith.constant 3 : index
    %17 = memref.load %arg2[%c3] : memref<15xf32, #tpu.memory_space<smem>>
    %18 = vector.broadcast %17 : f32 to vector<2x150xf32>
    %19 = arith.mulf %1, %18 : vector<2x150xf32>
    %c4 = arith.constant 4 : index
    %20 = memref.load %arg2[%c4] : memref<15xf32, #tpu.memory_space<smem>>
    %21 = vector.broadcast %20 : f32 to vector<2x150xf32>
    %22 = arith.mulf %3, %21 : vector<2x150xf32>
    %23 = arith.addf %19, %22 : vector<2x150xf32>
    %c5 = arith.constant 5 : index
    %24 = memref.load %arg2[%c5] : memref<15xf32, #tpu.memory_space<smem>>
    %25 = vector.broadcast %24 : f32 to vector<2x150xf32>
    %26 = arith.mulf %5, %25 : vector<2x150xf32>
    %27 = arith.addf %23, %26 : vector<2x150xf32>
    %c6 = arith.constant 6 : index
    %28 = memref.load %arg2[%c6] : memref<15xf32, #tpu.memory_space<smem>>
    %29 = vector.broadcast %28 : f32 to vector<2x150xf32>
    %30 = arith.mulf %1, %29 : vector<2x150xf32>
    %c7 = arith.constant 7 : index
    %31 = memref.load %arg2[%c7] : memref<15xf32, #tpu.memory_space<smem>>
    %32 = vector.broadcast %31 : f32 to vector<2x150xf32>
    %33 = arith.mulf %3, %32 : vector<2x150xf32>
    %34 = arith.addf %30, %33 : vector<2x150xf32>
    %c8 = arith.constant 8 : index
    %35 = memref.load %arg2[%c8] : memref<15xf32, #tpu.memory_space<smem>>
    %36 = vector.broadcast %35 : f32 to vector<2x150xf32>
    %37 = arith.mulf %5, %36 : vector<2x150xf32>
    %38 = arith.addf %34, %37 : vector<2x150xf32>
    %c9 = arith.constant 9 : index
    %39 = memref.load %arg2[%c9] : memref<15xf32, #tpu.memory_space<smem>>
    %40 = vector.broadcast %39 : f32 to vector<2x150xf32>
    %41 = arith.mulf %1, %40 : vector<2x150xf32>
    %c10 = arith.constant 10 : index
    %42 = memref.load %arg2[%c10] : memref<15xf32, #tpu.memory_space<smem>>
    %43 = vector.broadcast %42 : f32 to vector<2x150xf32>
    %44 = arith.mulf %3, %43 : vector<2x150xf32>
    %45 = arith.addf %41, %44 : vector<2x150xf32>
    %c11 = arith.constant 11 : index
    %46 = memref.load %arg2[%c11] : memref<15xf32, #tpu.memory_space<smem>>
    %47 = vector.broadcast %46 : f32 to vector<2x150xf32>
    %48 = arith.mulf %5, %47 : vector<2x150xf32>
    %49 = arith.addf %45, %48 : vector<2x150xf32>
    %c12 = arith.constant 12 : index
    %50 = memref.load %arg2[%c12] : memref<15xf32, #tpu.memory_space<smem>>
    %51 = vector.broadcast %50 : f32 to vector<2x150xf32>
    %52 = arith.mulf %1, %51 : vector<2x150xf32>
    %c13 = arith.constant 13 : index
    %53 = memref.load %arg2[%c13] : memref<15xf32, #tpu.memory_space<smem>>
    %54 = vector.broadcast %53 : f32 to vector<2x150xf32>
    %55 = arith.mulf %3, %54 : vector<2x150xf32>
    %56 = arith.addf %52, %55 : vector<2x150xf32>
    %c14 = arith.constant 14 : index
    %57 = memref.load %arg2[%c14] : memref<15xf32, #tpu.memory_space<smem>>
    %58 = vector.broadcast %57 : f32 to vector<2x150xf32>
    %59 = arith.mulf %5, %58 : vector<2x150xf32>
    %60 = arith.addf %56, %59 : vector<2x150xf32>
    %c0_12 = arith.constant 0 : index
    %c1_13 = arith.constant 1 : index
    %c0_14 = arith.constant 0 : index
    %c0_15 = arith.constant 0 : index
    %61 = vector.load %arg1[%c0_12, %c1_13, %c0_14, %c0_15] : memref<1x12x2x150xf32, #tpu.memory_space<vmem>>, vector<1x1x2x150xf32>
    %62 = vector.shape_cast %61 : vector<1x1x2x150xf32> to vector<2x150xf32>
    %c0_16 = arith.constant 0 : index
    %c2_17 = arith.constant 2 : index
    %c0_18 = arith.constant 0 : index
    %c0_19 = arith.constant 0 : index
    %63 = vector.load %arg1[%c0_16, %c2_17, %c0_18, %c0_19] : memref<1x12x2x150xf32, #tpu.memory_space<vmem>>, vector<1x1x2x150xf32>
    %64 = vector.shape_cast %63 : vector<1x1x2x150xf32> to vector<2x150xf32>
    %c0_20 = arith.constant 0 : index
    %c3_21 = arith.constant 3 : index
    %c0_22 = arith.constant 0 : index
    %c0_23 = arith.constant 0 : index
    %65 = vector.load %arg1[%c0_20, %c3_21, %c0_22, %c0_23] : memref<1x12x2x150xf32, #tpu.memory_space<vmem>>, vector<1x1x2x150xf32>
    %66 = vector.shape_cast %65 : vector<1x1x2x150xf32> to vector<2x150xf32>
    %c0_24 = arith.constant 0 : index
    %67 = memref.load %arg2[%c0_24] : memref<15xf32, #tpu.memory_space<smem>>
    %68 = vector.broadcast %67 : f32 to vector<2x150xf32>
    %69 = arith.mulf %62, %68 : vector<2x150xf32>
    %c1_25 = arith.constant 1 : index
    %70 = memref.load %arg2[%c1_25] : memref<15xf32, #tpu.memory_space<smem>>
    %71 = vector.broadcast %70 : f32 to vector<2x150xf32>
    %72 = arith.mulf %64, %71 : vector<2x150xf32>
    %73 = arith.addf %69, %72 : vector<2x150xf32>
    %c2_26 = arith.constant 2 : index
    %74 = memref.load %arg2[%c2_26] : memref<15xf32, #tpu.memory_space<smem>>
    %75 = vector.broadcast %74 : f32 to vector<2x150xf32>
    %76 = arith.mulf %66, %75 : vector<2x150xf32>
    %77 = arith.addf %73, %76 : vector<2x150xf32>
    %c3_27 = arith.constant 3 : index
    %78 = memref.load %arg2[%c3_27] : memref<15xf32, #tpu.memory_space<smem>>
    %79 = vector.broadcast %78 : f32 to vector<2x150xf32>
    %80 = arith.mulf %62, %79 : vector<2x150xf32>
    %c4_28 = arith.constant 4 : index
    %81 = memref.load %arg2[%c4_28] : memref<15xf32, #tpu.memory_space<smem>>
    %82 = vector.broadcast %81 : f32 to vector<2x150xf32>
    %83 = arith.mulf %64, %82 : vector<2x150xf32>
    %84 = arith.addf %80, %83 : vector<2x150xf32>
    %c5_29 = arith.constant 5 : index
    %85 = memref.load %arg2[%c5_29] : memref<15xf32, #tpu.memory_space<smem>>
    %86 = vector.broadcast %85 : f32 to vector<2x150xf32>
    %87 = arith.mulf %66, %86 : vector<2x150xf32>
    %88 = arith.addf %84, %87 : vector<2x150xf32>
    %c6_30 = arith.constant 6 : index
    %89 = memref.load %arg2[%c6_30] : memref<15xf32, #tpu.memory_space<smem>>
    %90 = vector.broadcast %89 : f32 to vector<2x150xf32>
    %91 = arith.mulf %62, %90 : vector<2x150xf32>
    %c7_31 = arith.constant 7 : index
    %92 = memref.load %arg2[%c7_31] : memref<15xf32, #tpu.memory_space<smem>>
    %93 = vector.broadcast %92 : f32 to vector<2x150xf32>
    %94 = arith.mulf %64, %93 : vector<2x150xf32>
    %95 = arith.addf %91, %94 : vector<2x150xf32>
    %c8_32 = arith.constant 8 : index
    %96 = memref.load %arg2[%c8_32] : memref<15xf32, #tpu.memory_space<smem>>
    %97 = vector.broadcast %96 : f32 to vector<2x150xf32>
    %98 = arith.mulf %66, %97 : vector<2x150xf32>
    %99 = arith.addf %95, %98 : vector<2x150xf32>
    %c9_33 = arith.constant 9 : index
    %100 = memref.load %arg2[%c9_33] : memref<15xf32, #tpu.memory_space<smem>>
    %101 = vector.broadcast %100 : f32 to vector<2x150xf32>
    %102 = arith.mulf %62, %101 : vector<2x150xf32>
    %c10_34 = arith.constant 10 : index
    %103 = memref.load %arg2[%c10_34] : memref<15xf32, #tpu.memory_space<smem>>
    %104 = vector.broadcast %103 : f32 to vector<2x150xf32>
    %105 = arith.mulf %64, %104 : vector<2x150xf32>
    %106 = arith.addf %102, %105 : vector<2x150xf32>
    %c11_35 = arith.constant 11 : index
    %107 = memref.load %arg2[%c11_35] : memref<15xf32, #tpu.memory_space<smem>>
    %108 = vector.broadcast %107 : f32 to vector<2x150xf32>
    %109 = arith.mulf %66, %108 : vector<2x150xf32>
    %110 = arith.addf %106, %109 : vector<2x150xf32>
    %c12_36 = arith.constant 12 : index
    %111 = memref.load %arg2[%c12_36] : memref<15xf32, #tpu.memory_space<smem>>
    %112 = vector.broadcast %111 : f32 to vector<2x150xf32>
    %113 = arith.mulf %62, %112 : vector<2x150xf32>
    %c13_37 = arith.constant 13 : index
    %114 = memref.load %arg2[%c13_37] : memref<15xf32, #tpu.memory_space<smem>>
    %115 = vector.broadcast %114 : f32 to vector<2x150xf32>
    %116 = arith.mulf %64, %115 : vector<2x150xf32>
    %117 = arith.addf %113, %116 : vector<2x150xf32>
    %c14_38 = arith.constant 14 : index
    %118 = memref.load %arg2[%c14_38] : memref<15xf32, #tpu.memory_space<smem>>
    %119 = vector.broadcast %118 : f32 to vector<2x150xf32>
    %120 = arith.mulf %66, %119 : vector<2x150xf32>
    %121 = arith.addf %117, %120 : vector<2x150xf32>
    %c0_39 = arith.constant 0 : index
    %c2_40 = arith.constant 2 : index
    %c0_41 = arith.constant 0 : index
    %c0_42 = arith.constant 0 : index
    %122 = vector.load %arg1[%c0_39, %c2_40, %c0_41, %c0_42] : memref<1x12x2x150xf32, #tpu.memory_space<vmem>>, vector<1x1x2x150xf32>
    %123 = vector.shape_cast %122 : vector<1x1x2x150xf32> to vector<2x150xf32>
    %c0_43 = arith.constant 0 : index
    %c3_44 = arith.constant 3 : index
    %c0_45 = arith.constant 0 : index
    %c0_46 = arith.constant 0 : index
    %124 = vector.load %arg1[%c0_43, %c3_44, %c0_45, %c0_46] : memref<1x12x2x150xf32, #tpu.memory_space<vmem>>, vector<1x1x2x150xf32>
    %125 = vector.shape_cast %124 : vector<1x1x2x150xf32> to vector<2x150xf32>
    %c0_47 = arith.constant 0 : index
    %c4_48 = arith.constant 4 : index
    %c0_49 = arith.constant 0 : index
    %c0_50 = arith.constant 0 : index
    %126 = vector.load %arg1[%c0_47, %c4_48, %c0_49, %c0_50] : memref<1x12x2x150xf32, #tpu.memory_space<vmem>>, vector<1x1x2x150xf32>
    %127 = vector.shape_cast %126 : vector<1x1x2x150xf32> to vector<2x150xf32>
    %c0_51 = arith.constant 0 : index
    %128 = memref.load %arg2[%c0_51] : memref<15xf32, #tpu.memory_space<smem>>
    %129 = vector.broadcast %128 : f32 to vector<2x150xf32>
    %130 = arith.mulf %123, %129 : vector<2x150xf32>
    %c1_52 = arith.constant 1 : index
    %131 = memref.load %arg2[%c1_52] : memref<15xf32, #tpu.memory_space<smem>>
    %132 = vector.broadcast %131 : f32 to vector<2x150xf32>
    %133 = arith.mulf %125, %132 : vector<2x150xf32>
    %134 = arith.addf %130, %133 : vector<2x150xf32>
    %c2_53 = arith.constant 2 : index
    %135 = memref.load %arg2[%c2_53] : memref<15xf32, #tpu.memory_space<smem>>
    %136 = vector.broadcast %135 : f32 to vector<2x150xf32>
    %137 = arith.mulf %127, %136 : vector<2x150xf32>
    %138 = arith.addf %134, %137 : vector<2x150xf32>
    %139 = arith.maximumf %16, %138 : vector<2x150xf32>
    %c3_54 = arith.constant 3 : index
    %140 = memref.load %arg2[%c3_54] : memref<15xf32, #tpu.memory_space<smem>>
    %141 = vector.broadcast %140 : f32 to vector<2x150xf32>
    %142 = arith.mulf %123, %141 : vector<2x150xf32>
    %c4_55 = arith.constant 4 : index
    %143 = memref.load %arg2[%c4_55] : memref<15xf32, #tpu.memory_space<smem>>
    %144 = vector.broadcast %143 : f32 to vector<2x150xf32>
    %145 = arith.mulf %125, %144 : vector<2x150xf32>
    %146 = arith.addf %142, %145 : vector<2x150xf32>
    %c5_56 = arith.constant 5 : index
    %147 = memref.load %arg2[%c5_56] : memref<15xf32, #tpu.memory_space<smem>>
    %148 = vector.broadcast %147 : f32 to vector<2x150xf32>
    %149 = arith.mulf %127, %148 : vector<2x150xf32>
    %150 = arith.addf %146, %149 : vector<2x150xf32>
    %151 = arith.maximumf %27, %150 : vector<2x150xf32>
    %c6_57 = arith.constant 6 : index
    %152 = memref.load %arg2[%c6_57] : memref<15xf32, #tpu.memory_space<smem>>
    %153 = vector.broadcast %152 : f32 to vector<2x150xf32>
    %154 = arith.mulf %123, %153 : vector<2x150xf32>
    %c7_58 = arith.constant 7 : index
    %155 = memref.load %arg2[%c7_58] : memref<15xf32, #tpu.memory_space<smem>>
    %156 = vector.broadcast %155 : f32 to vector<2x150xf32>
    %157 = arith.mulf %125, %156 : vector<2x150xf32>
    %158 = arith.addf %154, %157 : vector<2x150xf32>
    %c8_59 = arith.constant 8 : index
    %159 = memref.load %arg2[%c8_59] : memref<15xf32, #tpu.memory_space<smem>>
    %160 = vector.broadcast %159 : f32 to vector<2x150xf32>
    %161 = arith.mulf %127, %160 : vector<2x150xf32>
    %162 = arith.addf %158, %161 : vector<2x150xf32>
    %163 = arith.maximumf %38, %162 : vector<2x150xf32>
    %c9_60 = arith.constant 9 : index
    %164 = memref.load %arg2[%c9_60] : memref<15xf32, #tpu.memory_space<smem>>
    %165 = vector.broadcast %164 : f32 to vector<2x150xf32>
    %166 = arith.mulf %123, %165 : vector<2x150xf32>
    %c10_61 = arith.constant 10 : index
    %167 = memref.load %arg2[%c10_61] : memref<15xf32, #tpu.memory_space<smem>>
    %168 = vector.broadcast %167 : f32 to vector<2x150xf32>
    %169 = arith.mulf %125, %168 : vector<2x150xf32>
    %170 = arith.addf %166, %169 : vector<2x150xf32>
    %c11_62 = arith.constant 11 : index
    %171 = memref.load %arg2[%c11_62] : memref<15xf32, #tpu.memory_space<smem>>
    %172 = vector.broadcast %171 : f32 to vector<2x150xf32>
    %173 = arith.mulf %127, %172 : vector<2x150xf32>
    %174 = arith.addf %170, %173 : vector<2x150xf32>
    %175 = arith.maximumf %49, %174 : vector<2x150xf32>
    %c12_63 = arith.constant 12 : index
    %176 = memref.load %arg2[%c12_63] : memref<15xf32, #tpu.memory_space<smem>>
    %177 = vector.broadcast %176 : f32 to vector<2x150xf32>
    %178 = arith.mulf %123, %177 : vector<2x150xf32>
    %c13_64 = arith.constant 13 : index
    %179 = memref.load %arg2[%c13_64] : memref<15xf32, #tpu.memory_space<smem>>
    %180 = vector.broadcast %179 : f32 to vector<2x150xf32>
    %181 = arith.mulf %125, %180 : vector<2x150xf32>
    %182 = arith.addf %178, %181 : vector<2x150xf32>
    %c14_65 = arith.constant 14 : index
    %183 = memref.load %arg2[%c14_65] : memref<15xf32, #tpu.memory_space<smem>>
    %184 = vector.broadcast %183 : f32 to vector<2x150xf32>
    %185 = arith.mulf %127, %184 : vector<2x150xf32>
    %186 = arith.addf %182, %185 : vector<2x150xf32>
    %187 = arith.maximumf %60, %186 : vector<2x150xf32>
    %c0_66 = arith.constant 0 : index
    %c3_67 = arith.constant 3 : index
    %c0_68 = arith.constant 0 : index
    %c0_69 = arith.constant 0 : index
    %188 = vector.load %arg1[%c0_66, %c3_67, %c0_68, %c0_69] : memref<1x12x2x150xf32, #tpu.memory_space<vmem>>, vector<1x1x2x150xf32>
    %189 = vector.shape_cast %188 : vector<1x1x2x150xf32> to vector<2x150xf32>
    %c0_70 = arith.constant 0 : index
    %c4_71 = arith.constant 4 : index
    %c0_72 = arith.constant 0 : index
    %c0_73 = arith.constant 0 : index
    %190 = vector.load %arg1[%c0_70, %c4_71, %c0_72, %c0_73] : memref<1x12x2x150xf32, #tpu.memory_space<vmem>>, vector<1x1x2x150xf32>
    %191 = vector.shape_cast %190 : vector<1x1x2x150xf32> to vector<2x150xf32>
    %c0_74 = arith.constant 0 : index
    %c5_75 = arith.constant 5 : index
    %c0_76 = arith.constant 0 : index
    %c0_77 = arith.constant 0 : index
    %192 = vector.load %arg1[%c0_74, %c5_75, %c0_76, %c0_77] : memref<1x12x2x150xf32, #tpu.memory_space<vmem>>, vector<1x1x2x150xf32>
    %193 = vector.shape_cast %192 : vector<1x1x2x150xf32> to vector<2x150xf32>
    %c0_78 = arith.constant 0 : index
    %194 = memref.load %arg2[%c0_78] : memref<15xf32, #tpu.memory_space<smem>>
    %195 = vector.broadcast %194 : f32 to vector<2x150xf32>
    %196 = arith.mulf %189, %195 : vector<2x150xf32>
    %c1_79 = arith.constant 1 : index
    %197 = memref.load %arg2[%c1_79] : memref<15xf32, #tpu.memory_space<smem>>
    %198 = vector.broadcast %197 : f32 to vector<2x150xf32>
    %199 = arith.mulf %191, %198 : vector<2x150xf32>
    %200 = arith.addf %196, %199 : vector<2x150xf32>
    %c2_80 = arith.constant 2 : index
    %201 = memref.load %arg2[%c2_80] : memref<15xf32, #tpu.memory_space<smem>>
    %202 = vector.broadcast %201 : f32 to vector<2x150xf32>
    %203 = arith.mulf %193, %202 : vector<2x150xf32>
    %204 = arith.addf %200, %203 : vector<2x150xf32>
    %205 = arith.maximumf %77, %204 : vector<2x150xf32>
    %c3_81 = arith.constant 3 : index
    %206 = memref.load %arg2[%c3_81] : memref<15xf32, #tpu.memory_space<smem>>
    %207 = vector.broadcast %206 : f32 to vector<2x150xf32>
    %208 = arith.mulf %189, %207 : vector<2x150xf32>
    %c4_82 = arith.constant 4 : index
    %209 = memref.load %arg2[%c4_82] : memref<15xf32, #tpu.memory_space<smem>>
    %210 = vector.broadcast %209 : f32 to vector<2x150xf32>
    %211 = arith.mulf %191, %210 : vector<2x150xf32>
    %212 = arith.addf %208, %211 : vector<2x150xf32>
    %c5_83 = arith.constant 5 : index
    %213 = memref.load %arg2[%c5_83] : memref<15xf32, #tpu.memory_space<smem>>
    %214 = vector.broadcast %213 : f32 to vector<2x150xf32>
    %215 = arith.mulf %193, %214 : vector<2x150xf32>
    %216 = arith.addf %212, %215 : vector<2x150xf32>
    %217 = arith.maximumf %88, %216 : vector<2x150xf32>
    %c6_84 = arith.constant 6 : index
    %218 = memref.load %arg2[%c6_84] : memref<15xf32, #tpu.memory_space<smem>>
    %219 = vector.broadcast %218 : f32 to vector<2x150xf32>
    %220 = arith.mulf %189, %219 : vector<2x150xf32>
    %c7_85 = arith.constant 7 : index
    %221 = memref.load %arg2[%c7_85] : memref<15xf32, #tpu.memory_space<smem>>
    %222 = vector.broadcast %221 : f32 to vector<2x150xf32>
    %223 = arith.mulf %191, %222 : vector<2x150xf32>
    %224 = arith.addf %220, %223 : vector<2x150xf32>
    %c8_86 = arith.constant 8 : index
    %225 = memref.load %arg2[%c8_86] : memref<15xf32, #tpu.memory_space<smem>>
    %226 = vector.broadcast %225 : f32 to vector<2x150xf32>
    %227 = arith.mulf %193, %226 : vector<2x150xf32>
    %228 = arith.addf %224, %227 : vector<2x150xf32>
    %229 = arith.maximumf %99, %228 : vector<2x150xf32>
    %c9_87 = arith.constant 9 : index
    %230 = memref.load %arg2[%c9_87] : memref<15xf32, #tpu.memory_space<smem>>
    %231 = vector.broadcast %230 : f32 to vector<2x150xf32>
    %232 = arith.mulf %189, %231 : vector<2x150xf32>
    %c10_88 = arith.constant 10 : index
    %233 = memref.load %arg2[%c10_88] : memref<15xf32, #tpu.memory_space<smem>>
    %234 = vector.broadcast %233 : f32 to vector<2x150xf32>
    %235 = arith.mulf %191, %234 : vector<2x150xf32>
    %236 = arith.addf %232, %235 : vector<2x150xf32>
    %c11_89 = arith.constant 11 : index
    %237 = memref.load %arg2[%c11_89] : memref<15xf32, #tpu.memory_space<smem>>
    %238 = vector.broadcast %237 : f32 to vector<2x150xf32>
    %239 = arith.mulf %193, %238 : vector<2x150xf32>
    %240 = arith.addf %236, %239 : vector<2x150xf32>
    %241 = arith.maximumf %110, %240 : vector<2x150xf32>
    %c12_90 = arith.constant 12 : index
    %242 = memref.load %arg2[%c12_90] : memref<15xf32, #tpu.memory_space<smem>>
    %243 = vector.broadcast %242 : f32 to vector<2x150xf32>
    %244 = arith.mulf %189, %243 : vector<2x150xf32>
    %c13_91 = arith.constant 13 : index
    %245 = memref.load %arg2[%c13_91] : memref<15xf32, #tpu.memory_space<smem>>
    %246 = vector.broadcast %245 : f32 to vector<2x150xf32>
    %247 = arith.mulf %191, %246 : vector<2x150xf32>
    %248 = arith.addf %244, %247 : vector<2x150xf32>
    %c14_92 = arith.constant 14 : index
    %249 = memref.load %arg2[%c14_92] : memref<15xf32, #tpu.memory_space<smem>>
    %250 = vector.broadcast %249 : f32 to vector<2x150xf32>
    %251 = arith.mulf %193, %250 : vector<2x150xf32>
    %252 = arith.addf %248, %251 : vector<2x150xf32>
    %253 = arith.maximumf %121, %252 : vector<2x150xf32>
    %c0_93 = arith.constant 0 : index
    %c4_94 = arith.constant 4 : index
    %c0_95 = arith.constant 0 : index
    %c0_96 = arith.constant 0 : index
    %254 = vector.load %arg1[%c0_93, %c4_94, %c0_95, %c0_96] : memref<1x12x2x150xf32, #tpu.memory_space<vmem>>, vector<1x1x2x150xf32>
    %255 = vector.shape_cast %254 : vector<1x1x2x150xf32> to vector<2x150xf32>
    %c0_97 = arith.constant 0 : index
    %c5_98 = arith.constant 5 : index
    %c0_99 = arith.constant 0 : index
    %c0_100 = arith.constant 0 : index
    %256 = vector.load %arg1[%c0_97, %c5_98, %c0_99, %c0_100] : memref<1x12x2x150xf32, #tpu.memory_space<vmem>>, vector<1x1x2x150xf32>
    %257 = vector.shape_cast %256 : vector<1x1x2x150xf32> to vector<2x150xf32>
    %c0_101 = arith.constant 0 : index
    %c6_102 = arith.constant 6 : index
    %c0_103 = arith.constant 0 : index
    %c0_104 = arith.constant 0 : index
    %258 = vector.load %arg1[%c0_101, %c6_102, %c0_103, %c0_104] : memref<1x12x2x150xf32, #tpu.memory_space<vmem>>, vector<1x1x2x150xf32>
    %259 = vector.shape_cast %258 : vector<1x1x2x150xf32> to vector<2x150xf32>
    %c0_105 = arith.constant 0 : index
    %260 = memref.load %arg2[%c0_105] : memref<15xf32, #tpu.memory_space<smem>>
    %261 = vector.broadcast %260 : f32 to vector<2x150xf32>
    %262 = arith.mulf %255, %261 : vector<2x150xf32>
    %c1_106 = arith.constant 1 : index
    %263 = memref.load %arg2[%c1_106] : memref<15xf32, #tpu.memory_space<smem>>
    %264 = vector.broadcast %263 : f32 to vector<2x150xf32>
    %265 = arith.mulf %257, %264 : vector<2x150xf32>
    %266 = arith.addf %262, %265 : vector<2x150xf32>
    %c2_107 = arith.constant 2 : index
    %267 = memref.load %arg2[%c2_107] : memref<15xf32, #tpu.memory_space<smem>>
    %268 = vector.broadcast %267 : f32 to vector<2x150xf32>
    %269 = arith.mulf %259, %268 : vector<2x150xf32>
    %270 = arith.addf %266, %269 : vector<2x150xf32>
    %271 = arith.maximumf %139, %270 : vector<2x150xf32>
    %c3_108 = arith.constant 3 : index
    %272 = memref.load %arg2[%c3_108] : memref<15xf32, #tpu.memory_space<smem>>
    %273 = vector.broadcast %272 : f32 to vector<2x150xf32>
    %274 = arith.mulf %255, %273 : vector<2x150xf32>
    %c4_109 = arith.constant 4 : index
    %275 = memref.load %arg2[%c4_109] : memref<15xf32, #tpu.memory_space<smem>>
    %276 = vector.broadcast %275 : f32 to vector<2x150xf32>
    %277 = arith.mulf %257, %276 : vector<2x150xf32>
    %278 = arith.addf %274, %277 : vector<2x150xf32>
    %c5_110 = arith.constant 5 : index
    %279 = memref.load %arg2[%c5_110] : memref<15xf32, #tpu.memory_space<smem>>
    %280 = vector.broadcast %279 : f32 to vector<2x150xf32>
    %281 = arith.mulf %259, %280 : vector<2x150xf32>
    %282 = arith.addf %278, %281 : vector<2x150xf32>
    %283 = arith.maximumf %151, %282 : vector<2x150xf32>
    %c6_111 = arith.constant 6 : index
    %284 = memref.load %arg2[%c6_111] : memref<15xf32, #tpu.memory_space<smem>>
    %285 = vector.broadcast %284 : f32 to vector<2x150xf32>
    %286 = arith.mulf %255, %285 : vector<2x150xf32>
    %c7_112 = arith.constant 7 : index
    %287 = memref.load %arg2[%c7_112] : memref<15xf32, #tpu.memory_space<smem>>
    %288 = vector.broadcast %287 : f32 to vector<2x150xf32>
    %289 = arith.mulf %257, %288 : vector<2x150xf32>
    %290 = arith.addf %286, %289 : vector<2x150xf32>
    %c8_113 = arith.constant 8 : index
    %291 = memref.load %arg2[%c8_113] : memref<15xf32, #tpu.memory_space<smem>>
    %292 = vector.broadcast %291 : f32 to vector<2x150xf32>
    %293 = arith.mulf %259, %292 : vector<2x150xf32>
    %294 = arith.addf %290, %293 : vector<2x150xf32>
    %295 = arith.maximumf %163, %294 : vector<2x150xf32>
    %c9_114 = arith.constant 9 : index
    %296 = memref.load %arg2[%c9_114] : memref<15xf32, #tpu.memory_space<smem>>
    %297 = vector.broadcast %296 : f32 to vector<2x150xf32>
    %298 = arith.mulf %255, %297 : vector<2x150xf32>
    %c10_115 = arith.constant 10 : index
    %299 = memref.load %arg2[%c10_115] : memref<15xf32, #tpu.memory_space<smem>>
    %300 = vector.broadcast %299 : f32 to vector<2x150xf32>
    %301 = arith.mulf %257, %300 : vector<2x150xf32>
    %302 = arith.addf %298, %301 : vector<2x150xf32>
    %c11_116 = arith.constant 11 : index
    %303 = memref.load %arg2[%c11_116] : memref<15xf32, #tpu.memory_space<smem>>
    %304 = vector.broadcast %303 : f32 to vector<2x150xf32>
    %305 = arith.mulf %259, %304 : vector<2x150xf32>
    %306 = arith.addf %302, %305 : vector<2x150xf32>
    %307 = arith.maximumf %175, %306 : vector<2x150xf32>
    %c12_117 = arith.constant 12 : index
    %308 = memref.load %arg2[%c12_117] : memref<15xf32, #tpu.memory_space<smem>>
    %309 = vector.broadcast %308 : f32 to vector<2x150xf32>
    %310 = arith.mulf %255, %309 : vector<2x150xf32>
    %c13_118 = arith.constant 13 : index
    %311 = memref.load %arg2[%c13_118] : memref<15xf32, #tpu.memory_space<smem>>
    %312 = vector.broadcast %311 : f32 to vector<2x150xf32>
    %313 = arith.mulf %257, %312 : vector<2x150xf32>
    %314 = arith.addf %310, %313 : vector<2x150xf32>
    %c14_119 = arith.constant 14 : index
    %315 = memref.load %arg2[%c14_119] : memref<15xf32, #tpu.memory_space<smem>>
    %316 = vector.broadcast %315 : f32 to vector<2x150xf32>
    %317 = arith.mulf %259, %316 : vector<2x150xf32>
    %318 = arith.addf %314, %317 : vector<2x150xf32>
    %319 = arith.maximumf %187, %318 : vector<2x150xf32>
    %c0_120 = arith.constant 0 : index
    %c5_121 = arith.constant 5 : index
    %c0_122 = arith.constant 0 : index
    %c0_123 = arith.constant 0 : index
    %320 = vector.load %arg1[%c0_120, %c5_121, %c0_122, %c0_123] : memref<1x12x2x150xf32, #tpu.memory_space<vmem>>, vector<1x1x2x150xf32>
    %321 = vector.shape_cast %320 : vector<1x1x2x150xf32> to vector<2x150xf32>
    %c0_124 = arith.constant 0 : index
    %c6_125 = arith.constant 6 : index
    %c0_126 = arith.constant 0 : index
    %c0_127 = arith.constant 0 : index
    %322 = vector.load %arg1[%c0_124, %c6_125, %c0_126, %c0_127] : memref<1x12x2x150xf32, #tpu.memory_space<vmem>>, vector<1x1x2x150xf32>
    %323 = vector.shape_cast %322 : vector<1x1x2x150xf32> to vector<2x150xf32>
    %c0_128 = arith.constant 0 : index
    %c7_129 = arith.constant 7 : index
    %c0_130 = arith.constant 0 : index
    %c0_131 = arith.constant 0 : index
    %324 = vector.load %arg1[%c0_128, %c7_129, %c0_130, %c0_131] : memref<1x12x2x150xf32, #tpu.memory_space<vmem>>, vector<1x1x2x150xf32>
    %325 = vector.shape_cast %324 : vector<1x1x2x150xf32> to vector<2x150xf32>
    %c0_132 = arith.constant 0 : index
    %326 = memref.load %arg2[%c0_132] : memref<15xf32, #tpu.memory_space<smem>>
    %327 = vector.broadcast %326 : f32 to vector<2x150xf32>
    %328 = arith.mulf %321, %327 : vector<2x150xf32>
    %c1_133 = arith.constant 1 : index
    %329 = memref.load %arg2[%c1_133] : memref<15xf32, #tpu.memory_space<smem>>
    %330 = vector.broadcast %329 : f32 to vector<2x150xf32>
    %331 = arith.mulf %323, %330 : vector<2x150xf32>
    %332 = arith.addf %328, %331 : vector<2x150xf32>
    %c2_134 = arith.constant 2 : index
    %333 = memref.load %arg2[%c2_134] : memref<15xf32, #tpu.memory_space<smem>>
    %334 = vector.broadcast %333 : f32 to vector<2x150xf32>
    %335 = arith.mulf %325, %334 : vector<2x150xf32>
    %336 = arith.addf %332, %335 : vector<2x150xf32>
    %337 = arith.maximumf %205, %336 : vector<2x150xf32>
    %c3_135 = arith.constant 3 : index
    %338 = memref.load %arg2[%c3_135] : memref<15xf32, #tpu.memory_space<smem>>
    %339 = vector.broadcast %338 : f32 to vector<2x150xf32>
    %340 = arith.mulf %321, %339 : vector<2x150xf32>
    %c4_136 = arith.constant 4 : index
    %341 = memref.load %arg2[%c4_136] : memref<15xf32, #tpu.memory_space<smem>>
    %342 = vector.broadcast %341 : f32 to vector<2x150xf32>
    %343 = arith.mulf %323, %342 : vector<2x150xf32>
    %344 = arith.addf %340, %343 : vector<2x150xf32>
    %c5_137 = arith.constant 5 : index
    %345 = memref.load %arg2[%c5_137] : memref<15xf32, #tpu.memory_space<smem>>
    %346 = vector.broadcast %345 : f32 to vector<2x150xf32>
    %347 = arith.mulf %325, %346 : vector<2x150xf32>
    %348 = arith.addf %344, %347 : vector<2x150xf32>
    %349 = arith.maximumf %217, %348 : vector<2x150xf32>
    %c6_138 = arith.constant 6 : index
    %350 = memref.load %arg2[%c6_138] : memref<15xf32, #tpu.memory_space<smem>>
    %351 = vector.broadcast %350 : f32 to vector<2x150xf32>
    %352 = arith.mulf %321, %351 : vector<2x150xf32>
    %c7_139 = arith.constant 7 : index
    %353 = memref.load %arg2[%c7_139] : memref<15xf32, #tpu.memory_space<smem>>
    %354 = vector.broadcast %353 : f32 to vector<2x150xf32>
    %355 = arith.mulf %323, %354 : vector<2x150xf32>
    %356 = arith.addf %352, %355 : vector<2x150xf32>
    %c8_140 = arith.constant 8 : index
    %357 = memref.load %arg2[%c8_140] : memref<15xf32, #tpu.memory_space<smem>>
    %358 = vector.broadcast %357 : f32 to vector<2x150xf32>
    %359 = arith.mulf %325, %358 : vector<2x150xf32>
    %360 = arith.addf %356, %359 : vector<2x150xf32>
    %361 = arith.maximumf %229, %360 : vector<2x150xf32>
    %c9_141 = arith.constant 9 : index
    %362 = memref.load %arg2[%c9_141] : memref<15xf32, #tpu.memory_space<smem>>
    %363 = vector.broadcast %362 : f32 to vector<2x150xf32>
    %364 = arith.mulf %321, %363 : vector<2x150xf32>
    %c10_142 = arith.constant 10 : index
    %365 = memref.load %arg2[%c10_142] : memref<15xf32, #tpu.memory_space<smem>>
    %366 = vector.broadcast %365 : f32 to vector<2x150xf32>
    %367 = arith.mulf %323, %366 : vector<2x150xf32>
    %368 = arith.addf %364, %367 : vector<2x150xf32>
    %c11_143 = arith.constant 11 : index
    %369 = memref.load %arg2[%c11_143] : memref<15xf32, #tpu.memory_space<smem>>
    %370 = vector.broadcast %369 : f32 to vector<2x150xf32>
    %371 = arith.mulf %325, %370 : vector<2x150xf32>
    %372 = arith.addf %368, %371 : vector<2x150xf32>
    %373 = arith.maximumf %241, %372 : vector<2x150xf32>
    %c12_144 = arith.constant 12 : index
    %374 = memref.load %arg2[%c12_144] : memref<15xf32, #tpu.memory_space<smem>>
    %375 = vector.broadcast %374 : f32 to vector<2x150xf32>
    %376 = arith.mulf %321, %375 : vector<2x150xf32>
    %c13_145 = arith.constant 13 : index
    %377 = memref.load %arg2[%c13_145] : memref<15xf32, #tpu.memory_space<smem>>
    %378 = vector.broadcast %377 : f32 to vector<2x150xf32>
    %379 = arith.mulf %323, %378 : vector<2x150xf32>
    %380 = arith.addf %376, %379 : vector<2x150xf32>
    %c14_146 = arith.constant 14 : index
    %381 = memref.load %arg2[%c14_146] : memref<15xf32, #tpu.memory_space<smem>>
    %382 = vector.broadcast %381 : f32 to vector<2x150xf32>
    %383 = arith.mulf %325, %382 : vector<2x150xf32>
    %384 = arith.addf %380, %383 : vector<2x150xf32>
    %385 = arith.maximumf %253, %384 : vector<2x150xf32>
    %c0_147 = arith.constant 0 : index
    %c6_148 = arith.constant 6 : index
    %c0_149 = arith.constant 0 : index
    %c0_150 = arith.constant 0 : index
    %386 = vector.load %arg1[%c0_147, %c6_148, %c0_149, %c0_150] : memref<1x12x2x150xf32, #tpu.memory_space<vmem>>, vector<1x1x2x150xf32>
    %387 = vector.shape_cast %386 : vector<1x1x2x150xf32> to vector<2x150xf32>
    %c0_151 = arith.constant 0 : index
    %c7_152 = arith.constant 7 : index
    %c0_153 = arith.constant 0 : index
    %c0_154 = arith.constant 0 : index
    %388 = vector.load %arg1[%c0_151, %c7_152, %c0_153, %c0_154] : memref<1x12x2x150xf32, #tpu.memory_space<vmem>>, vector<1x1x2x150xf32>
    %389 = vector.shape_cast %388 : vector<1x1x2x150xf32> to vector<2x150xf32>
    %c0_155 = arith.constant 0 : index
    %c8_156 = arith.constant 8 : index
    %c0_157 = arith.constant 0 : index
    %c0_158 = arith.constant 0 : index
    %390 = vector.load %arg1[%c0_155, %c8_156, %c0_157, %c0_158] : memref<1x12x2x150xf32, #tpu.memory_space<vmem>>, vector<1x1x2x150xf32>
    %391 = vector.shape_cast %390 : vector<1x1x2x150xf32> to vector<2x150xf32>
    %c0_159 = arith.constant 0 : index
    %392 = memref.load %arg2[%c0_159] : memref<15xf32, #tpu.memory_space<smem>>
    %393 = vector.broadcast %392 : f32 to vector<2x150xf32>
    %394 = arith.mulf %387, %393 : vector<2x150xf32>
    %c1_160 = arith.constant 1 : index
    %395 = memref.load %arg2[%c1_160] : memref<15xf32, #tpu.memory_space<smem>>
    %396 = vector.broadcast %395 : f32 to vector<2x150xf32>
    %397 = arith.mulf %389, %396 : vector<2x150xf32>
    %398 = arith.addf %394, %397 : vector<2x150xf32>
    %c2_161 = arith.constant 2 : index
    %399 = memref.load %arg2[%c2_161] : memref<15xf32, #tpu.memory_space<smem>>
    %400 = vector.broadcast %399 : f32 to vector<2x150xf32>
    %401 = arith.mulf %391, %400 : vector<2x150xf32>
    %402 = arith.addf %398, %401 : vector<2x150xf32>
    %403 = arith.maximumf %271, %402 : vector<2x150xf32>
    %c3_162 = arith.constant 3 : index
    %404 = memref.load %arg2[%c3_162] : memref<15xf32, #tpu.memory_space<smem>>
    %405 = vector.broadcast %404 : f32 to vector<2x150xf32>
    %406 = arith.mulf %387, %405 : vector<2x150xf32>
    %c4_163 = arith.constant 4 : index
    %407 = memref.load %arg2[%c4_163] : memref<15xf32, #tpu.memory_space<smem>>
    %408 = vector.broadcast %407 : f32 to vector<2x150xf32>
    %409 = arith.mulf %389, %408 : vector<2x150xf32>
    %410 = arith.addf %406, %409 : vector<2x150xf32>
    %c5_164 = arith.constant 5 : index
    %411 = memref.load %arg2[%c5_164] : memref<15xf32, #tpu.memory_space<smem>>
    %412 = vector.broadcast %411 : f32 to vector<2x150xf32>
    %413 = arith.mulf %391, %412 : vector<2x150xf32>
    %414 = arith.addf %410, %413 : vector<2x150xf32>
    %415 = arith.maximumf %283, %414 : vector<2x150xf32>
    %c6_165 = arith.constant 6 : index
    %416 = memref.load %arg2[%c6_165] : memref<15xf32, #tpu.memory_space<smem>>
    %417 = vector.broadcast %416 : f32 to vector<2x150xf32>
    %418 = arith.mulf %387, %417 : vector<2x150xf32>
    %c7_166 = arith.constant 7 : index
    %419 = memref.load %arg2[%c7_166] : memref<15xf32, #tpu.memory_space<smem>>
    %420 = vector.broadcast %419 : f32 to vector<2x150xf32>
    %421 = arith.mulf %389, %420 : vector<2x150xf32>
    %422 = arith.addf %418, %421 : vector<2x150xf32>
    %c8_167 = arith.constant 8 : index
    %423 = memref.load %arg2[%c8_167] : memref<15xf32, #tpu.memory_space<smem>>
    %424 = vector.broadcast %423 : f32 to vector<2x150xf32>
    %425 = arith.mulf %391, %424 : vector<2x150xf32>
    %426 = arith.addf %422, %425 : vector<2x150xf32>
    %427 = arith.maximumf %295, %426 : vector<2x150xf32>
    %c9_168 = arith.constant 9 : index
    %428 = memref.load %arg2[%c9_168] : memref<15xf32, #tpu.memory_space<smem>>
    %429 = vector.broadcast %428 : f32 to vector<2x150xf32>
    %430 = arith.mulf %387, %429 : vector<2x150xf32>
    %c10_169 = arith.constant 10 : index
    %431 = memref.load %arg2[%c10_169] : memref<15xf32, #tpu.memory_space<smem>>
    %432 = vector.broadcast %431 : f32 to vector<2x150xf32>
    %433 = arith.mulf %389, %432 : vector<2x150xf32>
    %434 = arith.addf %430, %433 : vector<2x150xf32>
    %c11_170 = arith.constant 11 : index
    %435 = memref.load %arg2[%c11_170] : memref<15xf32, #tpu.memory_space<smem>>
    %436 = vector.broadcast %435 : f32 to vector<2x150xf32>
    %437 = arith.mulf %391, %436 : vector<2x150xf32>
    %438 = arith.addf %434, %437 : vector<2x150xf32>
    %439 = arith.maximumf %307, %438 : vector<2x150xf32>
    %c12_171 = arith.constant 12 : index
    %440 = memref.load %arg2[%c12_171] : memref<15xf32, #tpu.memory_space<smem>>
    %441 = vector.broadcast %440 : f32 to vector<2x150xf32>
    %442 = arith.mulf %387, %441 : vector<2x150xf32>
    %c13_172 = arith.constant 13 : index
    %443 = memref.load %arg2[%c13_172] : memref<15xf32, #tpu.memory_space<smem>>
    %444 = vector.broadcast %443 : f32 to vector<2x150xf32>
    %445 = arith.mulf %389, %444 : vector<2x150xf32>
    %446 = arith.addf %442, %445 : vector<2x150xf32>
    %c14_173 = arith.constant 14 : index
    %447 = memref.load %arg2[%c14_173] : memref<15xf32, #tpu.memory_space<smem>>
    %448 = vector.broadcast %447 : f32 to vector<2x150xf32>
    %449 = arith.mulf %391, %448 : vector<2x150xf32>
    %450 = arith.addf %446, %449 : vector<2x150xf32>
    %451 = arith.maximumf %319, %450 : vector<2x150xf32>
    %c0_174 = arith.constant 0 : index
    %c7_175 = arith.constant 7 : index
    %c0_176 = arith.constant 0 : index
    %c0_177 = arith.constant 0 : index
    %452 = vector.load %arg1[%c0_174, %c7_175, %c0_176, %c0_177] : memref<1x12x2x150xf32, #tpu.memory_space<vmem>>, vector<1x1x2x150xf32>
    %453 = vector.shape_cast %452 : vector<1x1x2x150xf32> to vector<2x150xf32>
    %c0_178 = arith.constant 0 : index
    %c8_179 = arith.constant 8 : index
    %c0_180 = arith.constant 0 : index
    %c0_181 = arith.constant 0 : index
    %454 = vector.load %arg1[%c0_178, %c8_179, %c0_180, %c0_181] : memref<1x12x2x150xf32, #tpu.memory_space<vmem>>, vector<1x1x2x150xf32>
    %455 = vector.shape_cast %454 : vector<1x1x2x150xf32> to vector<2x150xf32>
    %c0_182 = arith.constant 0 : index
    %c9_183 = arith.constant 9 : index
    %c0_184 = arith.constant 0 : index
    %c0_185 = arith.constant 0 : index
    %456 = vector.load %arg1[%c0_182, %c9_183, %c0_184, %c0_185] : memref<1x12x2x150xf32, #tpu.memory_space<vmem>>, vector<1x1x2x150xf32>
    %457 = vector.shape_cast %456 : vector<1x1x2x150xf32> to vector<2x150xf32>
    %c0_186 = arith.constant 0 : index
    %458 = memref.load %arg2[%c0_186] : memref<15xf32, #tpu.memory_space<smem>>
    %459 = vector.broadcast %458 : f32 to vector<2x150xf32>
    %460 = arith.mulf %453, %459 : vector<2x150xf32>
    %c1_187 = arith.constant 1 : index
    %461 = memref.load %arg2[%c1_187] : memref<15xf32, #tpu.memory_space<smem>>
    %462 = vector.broadcast %461 : f32 to vector<2x150xf32>
    %463 = arith.mulf %455, %462 : vector<2x150xf32>
    %464 = arith.addf %460, %463 : vector<2x150xf32>
    %c2_188 = arith.constant 2 : index
    %465 = memref.load %arg2[%c2_188] : memref<15xf32, #tpu.memory_space<smem>>
    %466 = vector.broadcast %465 : f32 to vector<2x150xf32>
    %467 = arith.mulf %457, %466 : vector<2x150xf32>
    %468 = arith.addf %464, %467 : vector<2x150xf32>
    %469 = arith.maximumf %337, %468 : vector<2x150xf32>
    %c3_189 = arith.constant 3 : index
    %470 = memref.load %arg2[%c3_189] : memref<15xf32, #tpu.memory_space<smem>>
    %471 = vector.broadcast %470 : f32 to vector<2x150xf32>
    %472 = arith.mulf %453, %471 : vector<2x150xf32>
    %c4_190 = arith.constant 4 : index
    %473 = memref.load %arg2[%c4_190] : memref<15xf32, #tpu.memory_space<smem>>
    %474 = vector.broadcast %473 : f32 to vector<2x150xf32>
    %475 = arith.mulf %455, %474 : vector<2x150xf32>
    %476 = arith.addf %472, %475 : vector<2x150xf32>
    %c5_191 = arith.constant 5 : index
    %477 = memref.load %arg2[%c5_191] : memref<15xf32, #tpu.memory_space<smem>>
    %478 = vector.broadcast %477 : f32 to vector<2x150xf32>
    %479 = arith.mulf %457, %478 : vector<2x150xf32>
    %480 = arith.addf %476, %479 : vector<2x150xf32>
    %481 = arith.maximumf %349, %480 : vector<2x150xf32>
    %c6_192 = arith.constant 6 : index
    %482 = memref.load %arg2[%c6_192] : memref<15xf32, #tpu.memory_space<smem>>
    %483 = vector.broadcast %482 : f32 to vector<2x150xf32>
    %484 = arith.mulf %453, %483 : vector<2x150xf32>
    %c7_193 = arith.constant 7 : index
    %485 = memref.load %arg2[%c7_193] : memref<15xf32, #tpu.memory_space<smem>>
    %486 = vector.broadcast %485 : f32 to vector<2x150xf32>
    %487 = arith.mulf %455, %486 : vector<2x150xf32>
    %488 = arith.addf %484, %487 : vector<2x150xf32>
    %c8_194 = arith.constant 8 : index
    %489 = memref.load %arg2[%c8_194] : memref<15xf32, #tpu.memory_space<smem>>
    %490 = vector.broadcast %489 : f32 to vector<2x150xf32>
    %491 = arith.mulf %457, %490 : vector<2x150xf32>
    %492 = arith.addf %488, %491 : vector<2x150xf32>
    %493 = arith.maximumf %361, %492 : vector<2x150xf32>
    %c9_195 = arith.constant 9 : index
    %494 = memref.load %arg2[%c9_195] : memref<15xf32, #tpu.memory_space<smem>>
    %495 = vector.broadcast %494 : f32 to vector<2x150xf32>
    %496 = arith.mulf %453, %495 : vector<2x150xf32>
    %c10_196 = arith.constant 10 : index
    %497 = memref.load %arg2[%c10_196] : memref<15xf32, #tpu.memory_space<smem>>
    %498 = vector.broadcast %497 : f32 to vector<2x150xf32>
    %499 = arith.mulf %455, %498 : vector<2x150xf32>
    %500 = arith.addf %496, %499 : vector<2x150xf32>
    %c11_197 = arith.constant 11 : index
    %501 = memref.load %arg2[%c11_197] : memref<15xf32, #tpu.memory_space<smem>>
    %502 = vector.broadcast %501 : f32 to vector<2x150xf32>
    %503 = arith.mulf %457, %502 : vector<2x150xf32>
    %504 = arith.addf %500, %503 : vector<2x150xf32>
    %505 = arith.maximumf %373, %504 : vector<2x150xf32>
    %c12_198 = arith.constant 12 : index
    %506 = memref.load %arg2[%c12_198] : memref<15xf32, #tpu.memory_space<smem>>
    %507 = vector.broadcast %506 : f32 to vector<2x150xf32>
    %508 = arith.mulf %453, %507 : vector<2x150xf32>
    %c13_199 = arith.constant 13 : index
    %509 = memref.load %arg2[%c13_199] : memref<15xf32, #tpu.memory_space<smem>>
    %510 = vector.broadcast %509 : f32 to vector<2x150xf32>
    %511 = arith.mulf %455, %510 : vector<2x150xf32>
    %512 = arith.addf %508, %511 : vector<2x150xf32>
    %c14_200 = arith.constant 14 : index
    %513 = memref.load %arg2[%c14_200] : memref<15xf32, #tpu.memory_space<smem>>
    %514 = vector.broadcast %513 : f32 to vector<2x150xf32>
    %515 = arith.mulf %457, %514 : vector<2x150xf32>
    %516 = arith.addf %512, %515 : vector<2x150xf32>
    %517 = arith.maximumf %385, %516 : vector<2x150xf32>
    %c0_201 = arith.constant 0 : index
    %c8_202 = arith.constant 8 : index
    %c0_203 = arith.constant 0 : index
    %c0_204 = arith.constant 0 : index
    %518 = vector.load %arg1[%c0_201, %c8_202, %c0_203, %c0_204] : memref<1x12x2x150xf32, #tpu.memory_space<vmem>>, vector<1x1x2x150xf32>
    %519 = vector.shape_cast %518 : vector<1x1x2x150xf32> to vector<2x150xf32>
    %c0_205 = arith.constant 0 : index
    %c9_206 = arith.constant 9 : index
    %c0_207 = arith.constant 0 : index
    %c0_208 = arith.constant 0 : index
    %520 = vector.load %arg1[%c0_205, %c9_206, %c0_207, %c0_208] : memref<1x12x2x150xf32, #tpu.memory_space<vmem>>, vector<1x1x2x150xf32>
    %521 = vector.shape_cast %520 : vector<1x1x2x150xf32> to vector<2x150xf32>
    %c0_209 = arith.constant 0 : index
    %c10_210 = arith.constant 10 : index
    %c0_211 = arith.constant 0 : index
    %c0_212 = arith.constant 0 : index
    %522 = vector.load %arg1[%c0_209, %c10_210, %c0_211, %c0_212] : memref<1x12x2x150xf32, #tpu.memory_space<vmem>>, vector<1x1x2x150xf32>
    %523 = vector.shape_cast %522 : vector<1x1x2x150xf32> to vector<2x150xf32>
    %c0_213 = arith.constant 0 : index
    %524 = memref.load %arg2[%c0_213] : memref<15xf32, #tpu.memory_space<smem>>
    %525 = vector.broadcast %524 : f32 to vector<2x150xf32>
    %526 = arith.mulf %519, %525 : vector<2x150xf32>
    %c1_214 = arith.constant 1 : index
    %527 = memref.load %arg2[%c1_214] : memref<15xf32, #tpu.memory_space<smem>>
    %528 = vector.broadcast %527 : f32 to vector<2x150xf32>
    %529 = arith.mulf %521, %528 : vector<2x150xf32>
    %530 = arith.addf %526, %529 : vector<2x150xf32>
    %c2_215 = arith.constant 2 : index
    %531 = memref.load %arg2[%c2_215] : memref<15xf32, #tpu.memory_space<smem>>
    %532 = vector.broadcast %531 : f32 to vector<2x150xf32>
    %533 = arith.mulf %523, %532 : vector<2x150xf32>
    %534 = arith.addf %530, %533 : vector<2x150xf32>
    %535 = arith.maximumf %403, %534 : vector<2x150xf32>
    %c3_216 = arith.constant 3 : index
    %536 = memref.load %arg2[%c3_216] : memref<15xf32, #tpu.memory_space<smem>>
    %537 = vector.broadcast %536 : f32 to vector<2x150xf32>
    %538 = arith.mulf %519, %537 : vector<2x150xf32>
    %c4_217 = arith.constant 4 : index
    %539 = memref.load %arg2[%c4_217] : memref<15xf32, #tpu.memory_space<smem>>
    %540 = vector.broadcast %539 : f32 to vector<2x150xf32>
    %541 = arith.mulf %521, %540 : vector<2x150xf32>
    %542 = arith.addf %538, %541 : vector<2x150xf32>
    %c5_218 = arith.constant 5 : index
    %543 = memref.load %arg2[%c5_218] : memref<15xf32, #tpu.memory_space<smem>>
    %544 = vector.broadcast %543 : f32 to vector<2x150xf32>
    %545 = arith.mulf %523, %544 : vector<2x150xf32>
    %546 = arith.addf %542, %545 : vector<2x150xf32>
    %547 = arith.maximumf %415, %546 : vector<2x150xf32>
    %c6_219 = arith.constant 6 : index
    %548 = memref.load %arg2[%c6_219] : memref<15xf32, #tpu.memory_space<smem>>
    %549 = vector.broadcast %548 : f32 to vector<2x150xf32>
    %550 = arith.mulf %519, %549 : vector<2x150xf32>
    %c7_220 = arith.constant 7 : index
    %551 = memref.load %arg2[%c7_220] : memref<15xf32, #tpu.memory_space<smem>>
    %552 = vector.broadcast %551 : f32 to vector<2x150xf32>
    %553 = arith.mulf %521, %552 : vector<2x150xf32>
    %554 = arith.addf %550, %553 : vector<2x150xf32>
    %c8_221 = arith.constant 8 : index
    %555 = memref.load %arg2[%c8_221] : memref<15xf32, #tpu.memory_space<smem>>
    %556 = vector.broadcast %555 : f32 to vector<2x150xf32>
    %557 = arith.mulf %523, %556 : vector<2x150xf32>
    %558 = arith.addf %554, %557 : vector<2x150xf32>
    %559 = arith.maximumf %427, %558 : vector<2x150xf32>
    %c9_222 = arith.constant 9 : index
    %560 = memref.load %arg2[%c9_222] : memref<15xf32, #tpu.memory_space<smem>>
    %561 = vector.broadcast %560 : f32 to vector<2x150xf32>
    %562 = arith.mulf %519, %561 : vector<2x150xf32>
    %c10_223 = arith.constant 10 : index
    %563 = memref.load %arg2[%c10_223] : memref<15xf32, #tpu.memory_space<smem>>
    %564 = vector.broadcast %563 : f32 to vector<2x150xf32>
    %565 = arith.mulf %521, %564 : vector<2x150xf32>
    %566 = arith.addf %562, %565 : vector<2x150xf32>
    %c11_224 = arith.constant 11 : index
    %567 = memref.load %arg2[%c11_224] : memref<15xf32, #tpu.memory_space<smem>>
    %568 = vector.broadcast %567 : f32 to vector<2x150xf32>
    %569 = arith.mulf %523, %568 : vector<2x150xf32>
    %570 = arith.addf %566, %569 : vector<2x150xf32>
    %571 = arith.maximumf %439, %570 : vector<2x150xf32>
    %c12_225 = arith.constant 12 : index
    %572 = memref.load %arg2[%c12_225] : memref<15xf32, #tpu.memory_space<smem>>
    %573 = vector.broadcast %572 : f32 to vector<2x150xf32>
    %574 = arith.mulf %519, %573 : vector<2x150xf32>
    %c13_226 = arith.constant 13 : index
    %575 = memref.load %arg2[%c13_226] : memref<15xf32, #tpu.memory_space<smem>>
    %576 = vector.broadcast %575 : f32 to vector<2x150xf32>
    %577 = arith.mulf %521, %576 : vector<2x150xf32>
    %578 = arith.addf %574, %577 : vector<2x150xf32>
    %c14_227 = arith.constant 14 : index
    %579 = memref.load %arg2[%c14_227] : memref<15xf32, #tpu.memory_space<smem>>
    %580 = vector.broadcast %579 : f32 to vector<2x150xf32>
    %581 = arith.mulf %523, %580 : vector<2x150xf32>
    %582 = arith.addf %578, %581 : vector<2x150xf32>
    %583 = arith.maximumf %451, %582 : vector<2x150xf32>
    %c0_228 = arith.constant 0 : index
    %c9_229 = arith.constant 9 : index
    %c0_230 = arith.constant 0 : index
    %c0_231 = arith.constant 0 : index
    %584 = vector.load %arg1[%c0_228, %c9_229, %c0_230, %c0_231] : memref<1x12x2x150xf32, #tpu.memory_space<vmem>>, vector<1x1x2x150xf32>
    %585 = vector.shape_cast %584 : vector<1x1x2x150xf32> to vector<2x150xf32>
    %c0_232 = arith.constant 0 : index
    %c10_233 = arith.constant 10 : index
    %c0_234 = arith.constant 0 : index
    %c0_235 = arith.constant 0 : index
    %586 = vector.load %arg1[%c0_232, %c10_233, %c0_234, %c0_235] : memref<1x12x2x150xf32, #tpu.memory_space<vmem>>, vector<1x1x2x150xf32>
    %587 = vector.shape_cast %586 : vector<1x1x2x150xf32> to vector<2x150xf32>
    %c0_236 = arith.constant 0 : index
    %c11_237 = arith.constant 11 : index
    %c0_238 = arith.constant 0 : index
    %c0_239 = arith.constant 0 : index
    %588 = vector.load %arg1[%c0_236, %c11_237, %c0_238, %c0_239] : memref<1x12x2x150xf32, #tpu.memory_space<vmem>>, vector<1x1x2x150xf32>
    %589 = vector.shape_cast %588 : vector<1x1x2x150xf32> to vector<2x150xf32>
    %c0_240 = arith.constant 0 : index
    %590 = memref.load %arg2[%c0_240] : memref<15xf32, #tpu.memory_space<smem>>
    %591 = vector.broadcast %590 : f32 to vector<2x150xf32>
    %592 = arith.mulf %585, %591 : vector<2x150xf32>
    %c1_241 = arith.constant 1 : index
    %593 = memref.load %arg2[%c1_241] : memref<15xf32, #tpu.memory_space<smem>>
    %594 = vector.broadcast %593 : f32 to vector<2x150xf32>
    %595 = arith.mulf %587, %594 : vector<2x150xf32>
    %596 = arith.addf %592, %595 : vector<2x150xf32>
    %c2_242 = arith.constant 2 : index
    %597 = memref.load %arg2[%c2_242] : memref<15xf32, #tpu.memory_space<smem>>
    %598 = vector.broadcast %597 : f32 to vector<2x150xf32>
    %599 = arith.mulf %589, %598 : vector<2x150xf32>
    %600 = arith.addf %596, %599 : vector<2x150xf32>
    %601 = arith.maximumf %469, %600 : vector<2x150xf32>
    %c3_243 = arith.constant 3 : index
    %602 = memref.load %arg2[%c3_243] : memref<15xf32, #tpu.memory_space<smem>>
    %603 = vector.broadcast %602 : f32 to vector<2x150xf32>
    %604 = arith.mulf %585, %603 : vector<2x150xf32>
    %c4_244 = arith.constant 4 : index
    %605 = memref.load %arg2[%c4_244] : memref<15xf32, #tpu.memory_space<smem>>
    %606 = vector.broadcast %605 : f32 to vector<2x150xf32>
    %607 = arith.mulf %587, %606 : vector<2x150xf32>
    %608 = arith.addf %604, %607 : vector<2x150xf32>
    %c5_245 = arith.constant 5 : index
    %609 = memref.load %arg2[%c5_245] : memref<15xf32, #tpu.memory_space<smem>>
    %610 = vector.broadcast %609 : f32 to vector<2x150xf32>
    %611 = arith.mulf %589, %610 : vector<2x150xf32>
    %612 = arith.addf %608, %611 : vector<2x150xf32>
    %613 = arith.maximumf %481, %612 : vector<2x150xf32>
    %c6_246 = arith.constant 6 : index
    %614 = memref.load %arg2[%c6_246] : memref<15xf32, #tpu.memory_space<smem>>
    %615 = vector.broadcast %614 : f32 to vector<2x150xf32>
    %616 = arith.mulf %585, %615 : vector<2x150xf32>
    %c7_247 = arith.constant 7 : index
    %617 = memref.load %arg2[%c7_247] : memref<15xf32, #tpu.memory_space<smem>>
    %618 = vector.broadcast %617 : f32 to vector<2x150xf32>
    %619 = arith.mulf %587, %618 : vector<2x150xf32>
    %620 = arith.addf %616, %619 : vector<2x150xf32>
    %c8_248 = arith.constant 8 : index
    %621 = memref.load %arg2[%c8_248] : memref<15xf32, #tpu.memory_space<smem>>
    %622 = vector.broadcast %621 : f32 to vector<2x150xf32>
    %623 = arith.mulf %589, %622 : vector<2x150xf32>
    %624 = arith.addf %620, %623 : vector<2x150xf32>
    %625 = arith.maximumf %493, %624 : vector<2x150xf32>
    %c9_249 = arith.constant 9 : index
    %626 = memref.load %arg2[%c9_249] : memref<15xf32, #tpu.memory_space<smem>>
    %627 = vector.broadcast %626 : f32 to vector<2x150xf32>
    %628 = arith.mulf %585, %627 : vector<2x150xf32>
    %c10_250 = arith.constant 10 : index
    %629 = memref.load %arg2[%c10_250] : memref<15xf32, #tpu.memory_space<smem>>
    %630 = vector.broadcast %629 : f32 to vector<2x150xf32>
    %631 = arith.mulf %587, %630 : vector<2x150xf32>
    %632 = arith.addf %628, %631 : vector<2x150xf32>
    %c11_251 = arith.constant 11 : index
    %633 = memref.load %arg2[%c11_251] : memref<15xf32, #tpu.memory_space<smem>>
    %634 = vector.broadcast %633 : f32 to vector<2x150xf32>
    %635 = arith.mulf %589, %634 : vector<2x150xf32>
    %636 = arith.addf %632, %635 : vector<2x150xf32>
    %637 = arith.maximumf %505, %636 : vector<2x150xf32>
    %c12_252 = arith.constant 12 : index
    %638 = memref.load %arg2[%c12_252] : memref<15xf32, #tpu.memory_space<smem>>
    %639 = vector.broadcast %638 : f32 to vector<2x150xf32>
    %640 = arith.mulf %585, %639 : vector<2x150xf32>
    %c13_253 = arith.constant 13 : index
    %641 = memref.load %arg2[%c13_253] : memref<15xf32, #tpu.memory_space<smem>>
    %642 = vector.broadcast %641 : f32 to vector<2x150xf32>
    %643 = arith.mulf %587, %642 : vector<2x150xf32>
    %644 = arith.addf %640, %643 : vector<2x150xf32>
    %c14_254 = arith.constant 14 : index
    %645 = memref.load %arg2[%c14_254] : memref<15xf32, #tpu.memory_space<smem>>
    %646 = vector.broadcast %645 : f32 to vector<2x150xf32>
    %647 = arith.mulf %589, %646 : vector<2x150xf32>
    %648 = arith.addf %644, %647 : vector<2x150xf32>
    %649 = arith.maximumf %517, %648 : vector<2x150xf32>
    %c0_255 = arith.constant 0 : index
    %c0_256 = arith.constant 0 : index
    %c0_257 = arith.constant 0 : index
    %650 = vector.load %arg4[%c0_255, %c0_256, %c0_257] : memref<2x5x150xf32, #tpu.memory_space<vmem>>, vector<1x1x150xf32>
    %651 = vector.shape_cast %650 : vector<1x1x150xf32> to vector<1x150xf32>
    %c0_258 = arith.constant 0 : index
    %c1_259 = arith.constant 1 : index
    %c0_260 = arith.constant 0 : index
    %652 = vector.load %arg4[%c0_258, %c1_259, %c0_260] : memref<2x5x150xf32, #tpu.memory_space<vmem>>, vector<1x1x150xf32>
    %653 = vector.shape_cast %652 : vector<1x1x150xf32> to vector<1x150xf32>
    %c0_261 = arith.constant 0 : index
    %c2_262 = arith.constant 2 : index
    %c0_263 = arith.constant 0 : index
    %654 = vector.load %arg4[%c0_261, %c2_262, %c0_263] : memref<2x5x150xf32, #tpu.memory_space<vmem>>, vector<1x1x150xf32>
    %655 = vector.shape_cast %654 : vector<1x1x150xf32> to vector<1x150xf32>
    %c0_264 = arith.constant 0 : index
    %c3_265 = arith.constant 3 : index
    %c0_266 = arith.constant 0 : index
    %656 = vector.load %arg4[%c0_264, %c3_265, %c0_266] : memref<2x5x150xf32, #tpu.memory_space<vmem>>, vector<1x1x150xf32>
    %657 = vector.shape_cast %656 : vector<1x1x150xf32> to vector<1x150xf32>
    %c0_267 = arith.constant 0 : index
    %c4_268 = arith.constant 4 : index
    %c0_269 = arith.constant 0 : index
    %658 = vector.load %arg4[%c0_267, %c4_268, %c0_269] : memref<2x5x150xf32, #tpu.memory_space<vmem>>, vector<1x1x150xf32>
    %659 = vector.shape_cast %658 : vector<1x1x150xf32> to vector<1x150xf32>
    %c1_270 = arith.constant 1 : index
    %c0_271 = arith.constant 0 : index
    %c0_272 = arith.constant 0 : index
    %660 = vector.load %arg4[%c1_270, %c0_271, %c0_272] : memref<2x5x150xf32, #tpu.memory_space<vmem>>, vector<1x1x150xf32>
    %661 = vector.shape_cast %660 : vector<1x1x150xf32> to vector<1x150xf32>
    %c1_273 = arith.constant 1 : index
    %c1_274 = arith.constant 1 : index
    %c0_275 = arith.constant 0 : index
    %662 = vector.load %arg4[%c1_273, %c1_274, %c0_275] : memref<2x5x150xf32, #tpu.memory_space<vmem>>, vector<1x1x150xf32>
    %663 = vector.shape_cast %662 : vector<1x1x150xf32> to vector<1x150xf32>
    %c1_276 = arith.constant 1 : index
    %c2_277 = arith.constant 2 : index
    %c0_278 = arith.constant 0 : index
    %664 = vector.load %arg4[%c1_276, %c2_277, %c0_278] : memref<2x5x150xf32, #tpu.memory_space<vmem>>, vector<1x1x150xf32>
    %665 = vector.shape_cast %664 : vector<1x1x150xf32> to vector<1x150xf32>
    %c1_279 = arith.constant 1 : index
    %c3_280 = arith.constant 3 : index
    %c0_281 = arith.constant 0 : index
    %666 = vector.load %arg4[%c1_279, %c3_280, %c0_281] : memref<2x5x150xf32, #tpu.memory_space<vmem>>, vector<1x1x150xf32>
    %667 = vector.shape_cast %666 : vector<1x1x150xf32> to vector<1x150xf32>
    %c1_282 = arith.constant 1 : index
    %c4_283 = arith.constant 4 : index
    %c0_284 = arith.constant 0 : index
    %668 = vector.load %arg4[%c1_282, %c4_283, %c0_284] : memref<2x5x150xf32, #tpu.memory_space<vmem>>, vector<1x1x150xf32>
    %669 = vector.shape_cast %668 : vector<1x1x150xf32> to vector<1x150xf32>
    %670 = arith.maximumf %535, %601 : vector<2x150xf32>
    %c0_285 = arith.constant 0 : index
    %671 = memref.load %arg3[%c0_285] : memref<5xf32, #tpu.memory_space<smem>>
    %672 = vector.broadcast %671 : f32 to vector<2x150xf32>
    %673 = arith.addf %670, %672 : vector<2x150xf32>
    %cst = arith.constant 0.000000e+00 : f32
    %674 = vector.broadcast %cst : f32 to vector<2x150xf32>
    %675 = arith.maximumf %673, %674 : vector<2x150xf32>
    %676 = vector.broadcast %651 : vector<1x150xf32> to vector<2x150xf32>
    %677 = arith.mulf %675, %676 : vector<2x150xf32>
    %678 = vector.broadcast %661 : vector<1x150xf32> to vector<2x150xf32>
    %679 = arith.mulf %675, %678 : vector<2x150xf32>
    %680 = arith.maximumf %547, %613 : vector<2x150xf32>
    %c1_286 = arith.constant 1 : index
    %681 = memref.load %arg3[%c1_286] : memref<5xf32, #tpu.memory_space<smem>>
    %682 = vector.broadcast %681 : f32 to vector<2x150xf32>
    %683 = arith.addf %680, %682 : vector<2x150xf32>
    %cst_287 = arith.constant 0.000000e+00 : f32
    %684 = vector.broadcast %cst_287 : f32 to vector<2x150xf32>
    %685 = arith.maximumf %683, %684 : vector<2x150xf32>
    %686 = vector.broadcast %653 : vector<1x150xf32> to vector<2x150xf32>
    %687 = arith.mulf %685, %686 : vector<2x150xf32>
    %688 = arith.addf %677, %687 : vector<2x150xf32>
    %689 = vector.broadcast %663 : vector<1x150xf32> to vector<2x150xf32>
    %690 = arith.mulf %685, %689 : vector<2x150xf32>
    %691 = arith.addf %679, %690 : vector<2x150xf32>
    %692 = arith.maximumf %559, %625 : vector<2x150xf32>
    %c2_288 = arith.constant 2 : index
    %693 = memref.load %arg3[%c2_288] : memref<5xf32, #tpu.memory_space<smem>>
    %694 = vector.broadcast %693 : f32 to vector<2x150xf32>
    %695 = arith.addf %692, %694 : vector<2x150xf32>
    %cst_289 = arith.constant 0.000000e+00 : f32
    %696 = vector.broadcast %cst_289 : f32 to vector<2x150xf32>
    %697 = arith.maximumf %695, %696 : vector<2x150xf32>
    %698 = vector.broadcast %655 : vector<1x150xf32> to vector<2x150xf32>
    %699 = arith.mulf %697, %698 : vector<2x150xf32>
    %700 = arith.addf %688, %699 : vector<2x150xf32>
    %701 = vector.broadcast %665 : vector<1x150xf32> to vector<2x150xf32>
    %702 = arith.mulf %697, %701 : vector<2x150xf32>
    %703 = arith.addf %691, %702 : vector<2x150xf32>
    %704 = arith.maximumf %571, %637 : vector<2x150xf32>
    %c3_290 = arith.constant 3 : index
    %705 = memref.load %arg3[%c3_290] : memref<5xf32, #tpu.memory_space<smem>>
    %706 = vector.broadcast %705 : f32 to vector<2x150xf32>
    %707 = arith.addf %704, %706 : vector<2x150xf32>
    %cst_291 = arith.constant 0.000000e+00 : f32
    %708 = vector.broadcast %cst_291 : f32 to vector<2x150xf32>
    %709 = arith.maximumf %707, %708 : vector<2x150xf32>
    %710 = vector.broadcast %657 : vector<1x150xf32> to vector<2x150xf32>
    %711 = arith.mulf %709, %710 : vector<2x150xf32>
    %712 = arith.addf %700, %711 : vector<2x150xf32>
    %713 = vector.broadcast %667 : vector<1x150xf32> to vector<2x150xf32>
    %714 = arith.mulf %709, %713 : vector<2x150xf32>
    %715 = arith.addf %703, %714 : vector<2x150xf32>
    %716 = arith.maximumf %583, %649 : vector<2x150xf32>
    %c4_292 = arith.constant 4 : index
    %717 = memref.load %arg3[%c4_292] : memref<5xf32, #tpu.memory_space<smem>>
    %718 = vector.broadcast %717 : f32 to vector<2x150xf32>
    %719 = arith.addf %716, %718 : vector<2x150xf32>
    %cst_293 = arith.constant 0.000000e+00 : f32
    %720 = vector.broadcast %cst_293 : f32 to vector<2x150xf32>
    %721 = arith.maximumf %719, %720 : vector<2x150xf32>
    %722 = vector.broadcast %659 : vector<1x150xf32> to vector<2x150xf32>
    %723 = arith.mulf %721, %722 : vector<2x150xf32>
    %724 = arith.addf %712, %723 : vector<2x150xf32>
    %725 = vector.broadcast %669 : vector<1x150xf32> to vector<2x150xf32>
    %726 = arith.mulf %721, %725 : vector<2x150xf32>
    %727 = arith.addf %715, %726 : vector<2x150xf32>
    %cst_294 = arith.constant dense<0.000000e+00> : vector<2xf32>
    %728 = vector.multi_reduction <add>, %724, %cst_294 [1] : vector<2x150xf32> to vector<2xf32>
    %729 = vector.shape_cast %728 : vector<2xf32> to vector<2x1xf32>
    %c0_295 = arith.constant 0 : index
    %730 = memref.load %arg5[%c0_295] : memref<2xf32, #tpu.memory_space<smem>>
    %731 = vector.broadcast %730 : f32 to vector<2x1xf32>
    %732 = arith.addf %729, %731 : vector<2x1xf32>
    %cst_296 = arith.constant dense<0.000000e+00> : vector<2xf32>
    %733 = vector.multi_reduction <add>, %727, %cst_296 [1] : vector<2x150xf32> to vector<2xf32>
    %734 = vector.shape_cast %733 : vector<2xf32> to vector<2x1xf32>
    %c1_297 = arith.constant 1 : index
    %735 = memref.load %arg5[%c1_297] : memref<2xf32, #tpu.memory_space<smem>>
    %736 = vector.broadcast %735 : f32 to vector<2x1xf32>
    %737 = arith.addf %734, %736 : vector<2x1xf32>
    %738 = tpu.concatenate %732, %737 in 1 : vector<2x1xf32>, vector<2x1xf32> -> vector<2x2xf32>
    %c0_298 = arith.constant 0 : index
    %c0_299 = arith.constant 0 : index
    %739 = vector.load %arg6[%c0_298, %c0_299] : memref<2x2xf32, #tpu.memory_space<vmem>>, vector<2x2xf32>
    tpu.vector_store %arg6[%c0_298, %c0_299], %738 {strides = array<i32>} : memref<2x2xf32, #tpu.memory_space<vmem>>, vector<2x2xf32>,
    return
  }
  func.func @transform_0(%arg0: i32) -> (i32, i32, i32, i32) {
    %c0_i32 = arith.constant 0 : i32
    %c0_i32_0 = arith.constant 0 : i32
    %c0_i32_1 = arith.constant 0 : i32
    %c0_i32_2 = arith.constant 0 : i32
    return %c0_i32, %c0_i32_0, %arg0, %c0_i32_1 : i32, i32, i32, i32
  }
  func.func @transform_1(%arg0: i32) -> i32 {
    %c0_i32 = arith.constant 0 : i32
    %c0_i32_0 = arith.constant 0 : i32
    return %c0_i32 : i32
  }
  func.func @transform_2(%arg0: i32) -> i32 {
    %c0_i32 = arith.constant 0 : i32
    %c0_i32_0 = arith.constant 0 : i32
    return %c0_i32 : i32
  }
  func.func @transform_3(%arg0: i32) -> (i32, i32, i32) {
    %c0_i32 = arith.constant 0 : i32
    %c0_i32_0 = arith.constant 0 : i32
    %c0_i32_1 = arith.constant 0 : i32
    %c0_i32_2 = arith.constant 0 : i32
    return %c0_i32, %c0_i32_0, %c0_i32_1 : i32, i32, i32
  }
  func.func @transform_4(%arg0: i32) -> i32 {
    %c0_i32 = arith.constant 0 : i32
    %c0_i32_0 = arith.constant 0 : i32
    return %c0_i32 : i32
  }
  func.func @transform_5(%arg0: i32) -> (i32, i32) {
    %c0_i32 = arith.constant 0 : i32
    %c0_i32_0 = arith.constant 0 : i32
    return %arg0, %c0_i32 : i32, i32
  }
}

</mosaic_0001>

<llo_original>
// kernel: tpu_custom_call.1
$region0: #{tpu_custom_call.1}
  #allocation0 [shape = 'u32[]', space=smem, size = 0x4, offset = 0x4, fixed_abs, tag = 'smem constant byte address 0x4 - core index']
  #allocation1 [shape = 'u32[144,128]{1,0:T(1,128)}', space=vmem, size = 0x12000, scoped, tag = 'internal scratch']
  %s0 = inlined_call_operand.vmem [shape: f32[1,12,2,150], index: 0, kind: input, shape index: {}]
  %s1 = inlined_call_operand.vmem [shape: f32[15], index: 1, kind: input, shape index: {}]
  %s2 = inlined_call_operand.vmem [shape: f32[5], index: 2, kind: input, shape index: {}]
  %s3 = inlined_call_operand.vmem [shape: f32[2,5,150], index: 3, kind: input, shape index: {}]
  %s4 = inlined_call_operand.vmem [shape: f32[2], index: 4, kind: input, shape index: {}]
  %s5 = inlined_call_operand.hbm [shape: f32[2,2], index: 5, kind: output, shape index: {}]
  %s6 = sld [smem:[#allocation0]]
  $region42: #{tpu_custom_call.1} parent=0
    _
  %s8 = ssub.s32 1, %s6
  %s9 = scalar_select 0, %s8, %s6
  $region1: #{tpu_custom_call.1} parent=0
    #allocation2 [shape = 'u8[512]{0}', space=smem, size = 0x200, scoped, tag = 'input window, operand 1, single buffered']
    #allocation3 [shape = 's32[1]{0}', space=sflag, size = 0x4, scoped, tag = 'scoped memory for tpu_custom_call.1']
    #allocation4 [shape = 's32[1]{0}', space=sflag, size = 0x4, scoped, tag = 'scoped memory for tpu_custom_call.1']
    #allocation5 [shape = 'u8[512]{0}', space=smem, size = 0x200, scoped, tag = 'input window, operand 2, single buffered']
    #allocation6 [shape = 's32[1]{0}', space=sflag, size = 0x4, scoped, tag = 'scoped memory for tpu_custom_call.1']
    #allocation7 [shape = 'u8[512]{0}', space=smem, size = 0x200, scoped, tag = 'input window, operand 4, single buffered']
    #allocation8 [shape = 'u8[1024]{0}', space=vmem, size = 0x400, scoped, tag = 'output window, operand 0, single buffered']
    %10 = vsyncpa [#allocation4], 0
    %11 = vsyncpa [#allocation6], 0
    %12 = vsyncpa [#allocation3], 0
    // Predicated region
    $region2: #{tpu_custom_call.1} parent=1 // pred_check
      _
    $region3: #{tpu_custom_call.1} parent=1 // pred_check_branch
      %14 = sbr.rel (0) target = $region5
    $region4: #{tpu_custom_call.1} parent=1 // pred_region
      _
    $region5: #{tpu_custom_call.1} parent=1 // pred_fallthru
      _
    // Predicated region
    $region6: #{tpu_custom_call.1} parent=1 // pred_check
      _
    $region7: #{tpu_custom_call.1} parent=1 // pred_check_branch
      %16 = sbr.rel (0) target = $region9
    $region8: #{tpu_custom_call.1} parent=1 // pred_region
      %s18 = ssub.s32 16, 16
      %19 = vsyncadd [#allocation4], %s18
      %s21 = sshll.u32 %s1, 4
      %s22 = int_to_ptr.vmem [resolvable:$true] %s21
      %24 = dma.vmem_to_smem %s22, 16, [#allocation2], [#allocation4]
    $region9: #{tpu_custom_call.1} parent=1 // pred_fallthru
      _
    // Predicated region
    $region10: #{tpu_custom_call.1} parent=1 // pred_check
      _
    $region11: #{tpu_custom_call.1} parent=1 // pred_check_branch
      %26 = sbr.rel (0) target = $region13
    $region12: #{tpu_custom_call.1} parent=1 // pred_region
      %s28 = ssub.s32 16, 16
      %29 = vsyncadd [#allocation6], %s28
      %s31 = sshll.u32 %s2, 4
      %s32 = int_to_ptr.vmem [resolvable:$true] %s31
      %34 = dma.vmem_to_smem %s32, 16, [#allocation5], [#allocation6]
    $region13: #{tpu_custom_call.1} parent=1 // pred_fallthru
      _
    // Predicated region
    $region14: #{tpu_custom_call.1} parent=1 // pred_check
      _
    $region15: #{tpu_custom_call.1} parent=1 // pred_check_branch
      %36 = sbr.rel (0) target = $region17
    $region16: #{tpu_custom_call.1} parent=1 // pred_region
      _
    $region17: #{tpu_custom_call.1} parent=1 // pred_fallthru
      _
    // Predicated region
    $region18: #{tpu_custom_call.1} parent=1 // pred_check
      _
    $region19: #{tpu_custom_call.1} parent=1 // pred_check_branch
      %38 = sbr.rel (0) target = $region21
    $region20: #{tpu_custom_call.1} parent=1 // pred_region
      %s40 = ssub.s32 16, 16
      %41 = vsyncadd [#allocation6], %s40
      %s43 = sshll.u32 %s4, 4
      %s44 = int_to_ptr.vmem [resolvable:$true] %s43
      %46 = dma.vmem_to_smem %s44, 16, [#allocation7], [#allocation6]
    $region21: #{tpu_custom_call.1} parent=1 // pred_fallthru
      _
    // Predicated region
    $region22: #{tpu_custom_call.1} parent=1 // pred_check
      _
    $region23: #{tpu_custom_call.1} parent=1 // pred_check_branch
      %48 = sbr.rel (0) target = $region25
    $region24: #{tpu_custom_call.1} parent=1 // pred_region
      %49 = dma.done [#allocation4], 16
    $region25: #{tpu_custom_call.1} parent=1 // pred_fallthru
      _
    // Predicated region
    $region26: #{tpu_custom_call.1} parent=1 // pred_check
      _
    $region27: #{tpu_custom_call.1} parent=1 // pred_check_branch
      %51 = sbr.rel (0) target = $region29
    $region28: #{tpu_custom_call.1} parent=1 // pred_region
      %52 = dma.done [#allocation6], 16
    $region29: #{tpu_custom_call.1} parent=1 // pred_fallthru
      _
    // Predicated region
    $region30: #{tpu_custom_call.1} parent=1 // pred_check
      _
    $region31: #{tpu_custom_call.1} parent=1 // pred_check_branch
      %54 = sbr.rel (0) target = $region33
    $region32: #{tpu_custom_call.1} parent=1 // pred_region
      %55 = dma.done [#allocation6], 16
    $region33: #{tpu_custom_call.1} parent=1 // pred_fallthru
      _
    %56 = sfence
    %v57 = vld [vmem:[%s0] sm:$0xf]
    %s58 = scalar_lea.vmem %s0, 4
    %v59 = vld [vmem:[%s58] sm:$0xf]
    %s60 = scalar_lea.vmem %s0, 8
    %v61 = vld [vmem:[%s60] sm:$0xf]
    %s62 = sld [smem:[#allocation2]]
    %v63 = vstv %s62
    %v64 = vmul.f32 %v57, %v63
    %s65 = sld [smem:[#allocation2 + $0x1]]
    %v66 = vstv %s65
    %v67 = vmul.f32 %v59, %v66
    %v68 = vadd.f32 %v64, %v67
    %s69 = sld [smem:[#allocation2 + $0x2]]
    %v70 = vstv %s69
    %v71 = vmul.f32 %v61, %v70
    %v72 = vadd.f32 %v68, %v71
    %s73 = sld [smem:[#allocation2 + $0x3]]
    %v74 = vstv %s73
    %v75 = vmul.f32 %v57, %v74
    %s76 = sld [smem:[#allocation2 + $0x4]]
    %v77 = vstv %s76
    %v78 = vmul.f32 %v59, %v77
    %v79 = vadd.f32 %v75, %v78
    %s80 = sld [smem:[#allocation2 + $0x5]]
    %v81 = vstv %s80
    %v82 = vmul.f32 %v61, %v81
    %v83 = vadd.f32 %v79, %v82
    %s84 = sld [smem:[#allocation2 + $0x6]]
    %v85 = vstv %s84
    %v86 = vmul.f32 %v57, %v85
    %s87 = sld [smem:[#allocation2 + $0x7]]
    %v88 = vstv %s87
    %v89 = vmul.f32 %v59, %v88
    %v90 = vadd.f32 %v86, %v89
    %s91 = sld [smem:[#allocation2 + $0x8]]
    %v92 = vstv %s91
    %v93 = vmul.f32 %v61, %v92
    %v94 = vadd.f32 %v90, %v93
    %s95 = sld [smem:[#allocation2 + $0x9]]
    %v96 = vstv %s95
    %v97 = vmul.f32 %v57, %v96
    %s98 = sld [smem:[#allocation2 + $0xa]]
    %v99 = vstv %s98
    %v100 = vmul.f32 %v59, %v99
    %v101 = vadd.f32 %v97, %v100
    %s102 = sld [smem:[#allocation2 + $0xb]]
    %v103 = vstv %s102
    %v104 = vmul.f32 %v61, %v103
    %v105 = vadd.f32 %v101, %v104
    %s106 = sld [smem:[#allocation2 + $0xc]]
    %v107 = vstv %s106
    %v108 = vmul.f32 %v57, %v107
    %s109 = sld [smem:[#allocation2 + $0xd]]
    %v110 = vstv %s109
    %v111 = vmul.f32 %v59, %v110
    %v112 = vadd.f32 %v108, %v111
    %s113 = sld [smem:[#allocation2 + $0xe]]
    %v114 = vstv %s113
    %v115 = vmul.f32 %v61, %v114
    %v116 = vadd.f32 %v112, %v115
    %s117 = scalar_lea.vmem %s0, 12
    %v118 = vld [vmem:[%s117] sm:$0xf]
    %v119 = vmul.f32 %v59, %v63
    %v120 = vmul.f32 %v61, %v66
    %v121 = vadd.f32 %v119, %v120
    %v122 = vmul.f32 %v118, %v70
    %v123 = vadd.f32 %v121, %v122
    %v124 = vmul.f32 %v59, %v74
    %v125 = vmul.f32 %v61, %v77
    %v126 = vadd.f32 %v124, %v125
    %v127 = vmul.f32 %v118, %v81
    %v128 = vadd.f32 %v126, %v127
    %v129 = vmul.f32 %v59, %v85
    %v130 = vmul.f32 %v61, %v88
    %v131 = vadd.f32 %v129, %v130
    %v132 = vmul.f32 %v118, %v92
    %v133 = vadd.f32 %v131, %v132
    %v134 = vmul.f32 %v59, %v96
    %v135 = vmul.f32 %v61, %v99
    %v136 = vadd.f32 %v134, %v135
    %v137 = vmul.f32 %v118, %v103
    %v138 = vadd.f32 %v136, %v137
    %v139 = vmul.f32 %v59, %v107
    %v140 = vmul.f32 %v61, %v110
    %v141 = vadd.f32 %v139, %v140
    %v142 = vmul.f32 %v118, %v114
    %v143 = vadd.f32 %v141, %v142
    %s144 = scalar_lea.vmem %s0, 16
    %v145 = vld [vmem:[%s144] sm:$0xf]
    %v146 = vmul.f32 %v61, %v63
    %v147 = vmul.f32 %v118, %v66
    %v148 = vadd.f32 %v146, %v147
    %v149 = vmul.f32 %v145, %v70
    %v150 = vadd.f32 %v148, %v149
    %v151 = vmax.f32 %v72, %v150
    %v152 = vmul.f32 %v61, %v74
    %v153 = vmul.f32 %v118, %v77
    %v154 = vadd.f32 %v152, %v153
    %v155 = vmul.f32 %v145, %v81
    %v156 = vadd.f32 %v154, %v155
    %v157 = vmax.f32 %v83, %v156
    %v158 = vmul.f32 %v61, %v85
    %v159 = vmul.f32 %v118, %v88
    %v160 = vadd.f32 %v158, %v159
    %v161 = vmul.f32 %v145, %v92
    %v162 = vadd.f32 %v160, %v161
    %v163 = vmax.f32 %v94, %v162
    %v164 = vmul.f32 %v61, %v96
    %v165 = vmul.f32 %v118, %v99
    %v166 = vadd.f32 %v164, %v165
    %v167 = vmul.f32 %v145, %v103
    %v168 = vadd.f32 %v166, %v167
    %v169 = vmax.f32 %v105, %v168
    %v170 = vmul.f32 %v61, %v107
    %v171 = vmul.f32 %v118, %v110
    %v172 = vadd.f32 %v170, %v171
    %v173 = vmul.f32 %v145, %v114
    %v174 = vadd.f32 %v172, %v173
    %v175 = vmax.f32 %v116, %v174
    %s176 = scalar_lea.vmem %s0, 20
    %v177 = vld [vmem:[%s176] sm:$0xf]
    %v178 = vmul.f32 %v118, %v63
    %v179 = vmul.f32 %v145, %v66
    %v180 = vadd.f32 %v178, %v179
    %v181 = vmul.f32 %v177, %v70
    %v182 = vadd.f32 %v180, %v181
    %v183 = vmax.f32 %v123, %v182
    %v184 = vmul.f32 %v118, %v74
    %v185 = vmul.f32 %v145, %v77
    %v186 = vadd.f32 %v184, %v185
    %v187 = vmul.f32 %v177, %v81
    %v188 = vadd.f32 %v186, %v187
    %v189 = vmax.f32 %v128, %v188
    %v190 = vmul.f32 %v118, %v85
    %v191 = vmul.f32 %v145, %v88
    %v192 = vadd.f32 %v190, %v191
    %v193 = vmul.f32 %v177, %v92
    %v194 = vadd.f32 %v192, %v193
    %v195 = vmax.f32 %v133, %v194
    %v196 = vmul.f32 %v118, %v96
    %v197 = vmul.f32 %v145, %v99
    %v198 = vadd.f32 %v196, %v197
    %v199 = vmul.f32 %v177, %v103
    %v200 = vadd.f32 %v198, %v199
    %v201 = vmax.f32 %v138, %v200
    %v202 = vmul.f32 %v118, %v107
    %v203 = vmul.f32 %v145, %v110
    %v204 = vadd.f32 %v202, %v203
    %v205 = vmul.f32 %v177, %v114
    %v206 = vadd.f32 %v204, %v205
    %v207 = vmax.f32 %v143, %v206
    %s208 = scalar_lea.vmem %s0, 24
    %v209 = vld [vmem:[%s208] sm:$0xf]
    %v210 = vmul.f32 %v145, %v63
    %v211 = vmul.f32 %v177, %v66
    %v212 = vadd.f32 %v210, %v211
    %v213 = vmul.f32 %v209, %v70
    %v214 = vadd.f32 %v212, %v213
    %v215 = vmax.f32 %v151, %v214
    %v216 = vmul.f32 %v145, %v74
    %v217 = vmul.f32 %v177, %v77
    %v218 = vadd.f32 %v216, %v217
    %v219 = vmul.f32 %v209, %v81
    %v220 = vadd.f32 %v218, %v219
    %v221 = vmax.f32 %v157, %v220
    %v222 = vmul.f32 %v145, %v85
    %v223 = vmul.f32 %v177, %v88
    %v224 = vadd.f32 %v222, %v223
    %v225 = vmul.f32 %v209, %v92
    %v226 = vadd.f32 %v224, %v225
    %v227 = vmax.f32 %v163, %v226
    %v228 = vmul.f32 %v145, %v96
    %v229 = vmul.f32 %v177, %v99
    %v230 = vadd.f32 %v228, %v229
    %v231 = vmul.f32 %v209, %v103
    %v232 = vadd.f32 %v230, %v231
    %v233 = vmax.f32 %v169, %v232
    %v234 = vmul.f32 %v145, %v107
    %v235 = vmul.f32 %v177, %v110
    %v236 = vadd.f32 %v234, %v235
    %v237 = vmul.f32 %v209, %v114
    %v238 = vadd.f32 %v236, %v237
    %v239 = vmax.f32 %v175, %v238
    %s240 = scalar_lea.vmem %s0, 28
    %v241 = vld [vmem:[%s240] sm:$0xf]
    %v242 = vmul.f32 %v177, %v63
    %v243 = vmul.f32 %v209, %v66
    %v244 = vadd.f32 %v242, %v243
    %v245 = vmul.f32 %v241, %v70
    %v246 = vadd.f32 %v244, %v245
    %v247 = vmax.f32 %v183, %v246
    %v248 = vmul.f32 %v177, %v74
    %v249 = vmul.f32 %v209, %v77
    %v250 = vadd.f32 %v248, %v249
    %v251 = vmul.f32 %v241, %v81
    %v252 = vadd.f32 %v250, %v251
    %v253 = vmax.f32 %v189, %v252
    %v254 = vmul.f32 %v177, %v85
    %v255 = vmul.f32 %v209, %v88
    %v256 = vadd.f32 %v254, %v255
    %v257 = vmul.f32 %v241, %v92
    %v258 = vadd.f32 %v256, %v257
    %v259 = vmax.f32 %v195, %v258
    %v260 = vmul.f32 %v177, %v96
    %v261 = vmul.f32 %v209, %v99
    %v262 = vadd.f32 %v260, %v261
    %v263 = vmul.f32 %v241, %v103
    %v264 = vadd.f32 %v262, %v263
    %v265 = vmax.f32 %v201, %v264
    %v266 = vmul.f32 %v177, %v107
    %v267 = vmul.f32 %v209, %v110
    %v268 = vadd.f32 %v266, %v267
    %v269 = vmul.f32 %v241, %v114
    %v270 = vadd.f32 %v268, %v269
    %v271 = vmax.f32 %v207, %v270
    %s272 = scalar_lea.vmem %s0, 32
    %v273 = vld [vmem:[%s272] sm:$0xf]
    %v274 = vmul.f32 %v209, %v63
    %v275 = vmul.f32 %v241, %v66
    %v276 = vadd.f32 %v274, %v275
    %v277 = vmul.f32 %v273, %v70
    %v278 = vadd.f32 %v276, %v277
    %v279 = vmax.f32 %v215, %v278
    %v280 = vmul.f32 %v209, %v74
    %v281 = vmul.f32 %v241, %v77
    %v282 = vadd.f32 %v280, %v281
    %v283 = vmul.f32 %v273, %v81
    %v284 = vadd.f32 %v282, %v283
    %v285 = vmax.f32 %v221, %v284
    %v286 = vmul.f32 %v209, %v85
    %v287 = vmul.f32 %v241, %v88
    %v288 = vadd.f32 %v286, %v287
    %v289 = vmul.f32 %v273, %v92
    %v290 = vadd.f32 %v288, %v289
    %v291 = vmax.f32 %v227, %v290
    %v292 = vmul.f32 %v209, %v96
    %v293 = vmul.f32 %v241, %v99
    %v294 = vadd.f32 %v292, %v293
    %v295 = vmul.f32 %v273, %v103
    %v296 = vadd.f32 %v294, %v295
    %v297 = vmax.f32 %v233, %v296
    %v298 = vmul.f32 %v209, %v107
    %v299 = vmul.f32 %v241, %v110
    %v300 = vadd.f32 %v298, %v299
    %v301 = vmul.f32 %v273, %v114
    %v302 = vadd.f32 %v300, %v301
    %v303 = vmax.f32 %v239, %v302
    %s304 = scalar_lea.vmem %s0, 36
    %v305 = vld [vmem:[%s304] sm:$0xf]
    %v306 = vmul.f32 %v241, %v63
    %v307 = vmul.f32 %v273, %v66
    %v308 = vadd.f32 %v306, %v307
    %v309 = vmul.f32 %v305, %v70
    %v310 = vadd.f32 %v308, %v309
    %v311 = vmax.f32 %v247, %v310
    %v312 = vmul.f32 %v241, %v74
    %v313 = vmul.f32 %v273, %v77
    %v314 = vadd.f32 %v312, %v313
    %v315 = vmul.f32 %v305, %v81
    %v316 = vadd.f32 %v314, %v315
    %v317 = vmax.f32 %v253, %v316
    %v318 = vmul.f32 %v241, %v85
    %v319 = vmul.f32 %v273, %v88
    %v320 = vadd.f32 %v318, %v319
    %v321 = vmul.f32 %v305, %v92
    %v322 = vadd.f32 %v320, %v321
    %v323 = vmax.f32 %v259, %v322
    %v324 = vmul.f32 %v241, %v96
    %v325 = vmul.f32 %v273, %v99
    %v326 = vadd.f32 %v324, %v325
    %v327 = vmul.f32 %v305, %v103
    %v328 = vadd.f32 %v326, %v327
    %v329 = vmax.f32 %v265, %v328
    %v330 = vmul.f32 %v241, %v107
    %v331 = vmul.f32 %v273, %v110
    %v332 = vadd.f32 %v330, %v331
    %v333 = vmul.f32 %v305, %v114
    %v334 = vadd.f32 %v332, %v333
    %v335 = vmax.f32 %v271, %v334
    %s336 = scalar_lea.vmem %s0, 40
    %v337 = vld [vmem:[%s336] sm:$0xf]
    %v338 = vmul.f32 %v273, %v63
    %v339 = vmul.f32 %v305, %v66
    %v340 = vadd.f32 %v338, %v339
    %v341 = vmul.f32 %v337, %v70
    %v342 = vadd.f32 %v340, %v341
    %v343 = vmax.f32 %v279, %v342
    %v344 = vmul.f32 %v273, %v74
    %v345 = vmul.f32 %v305, %v77
    %v346 = vadd.f32 %v344, %v345
    %v347 = vmul.f32 %v337, %v81
    %v348 = vadd.f32 %v346, %v347
    %v349 = vmax.f32 %v285, %v348
    %v350 = vmul.f32 %v273, %v85
    %v351 = vmul.f32 %v305, %v88
    %v352 = vadd.f32 %v350, %v351
    %v353 = vmul.f32 %v337, %v92
    %v354 = vadd.f32 %v352, %v353
    %v355 = vmax.f32 %v291, %v354
    %v356 = vmul.f32 %v273, %v96
    %v357 = vmul.f32 %v305, %v99
    %v358 = vadd.f32 %v356, %v357
    %v359 = vmul.f32 %v337, %v103
    %v360 = vadd.f32 %v358, %v359
    %v361 = vmax.f32 %v297, %v360
    %v362 = vmul.f32 %v273, %v107
    %v363 = vmul.f32 %v305, %v110
    %v364 = vadd.f32 %v362, %v363
    %v365 = vmul.f32 %v337, %v114
    %v366 = vadd.f32 %v364, %v365
    %v367 = vmax.f32 %v303, %v366
    %s368 = scalar_lea.vmem %s0, 44
    %v369 = vld [vmem:[%s368] sm:$0xf]
    %v370 = vmul.f32 %v305, %v63
    %v371 = vmul.f32 %v337, %v66
    %v372 = vadd.f32 %v370, %v371
    %v373 = vmul.f32 %v369, %v70
    %v374 = vadd.f32 %v372, %v373
    %v375 = vmax.f32 %v311, %v374
    %v376 = vmul.f32 %v305, %v74
    %v377 = vmul.f32 %v337, %v77
    %v378 = vadd.f32 %v376, %v377
    %v379 = vmul.f32 %v369, %v81
    %v380 = vadd.f32 %v378, %v379
    %v381 = vmax.f32 %v317, %v380
    %v382 = vmul.f32 %v305, %v85
    %v383 = vmul.f32 %v337, %v88
    %v384 = vadd.f32 %v382, %v383
    %v385 = vmul.f32 %v369, %v92
    %v386 = vadd.f32 %v384, %v385
    %v387 = vmax.f32 %v323, %v386
    %v388 = vmul.f32 %v305, %v96
    %v389 = vmul.f32 %v337, %v99
    %v390 = vadd.f32 %v388, %v389
    %v391 = vmul.f32 %v369, %v103
    %v392 = vadd.f32 %v390, %v391
    %v393 = vmax.f32 %v329, %v392
    %v394 = vmul.f32 %v305, %v107
    %v395 = vmul.f32 %v337, %v110
    %v396 = vadd.f32 %v394, %v395
    %v397 = vmul.f32 %v369, %v114
    %v398 = vadd.f32 %v396, %v397
    %v399 = vmax.f32 %v335, %v398
    %v400 = vld [vmem:[%s3] ss:$8 sm:$0x3]
    %s401 = scalar_lea.vmem %s3, 1
    %v402 = vld [vmem:[%s401] ss:$8 sm:$0x3]
    %s403 = scalar_lea.vmem %s3, 2
    %v404 = vld [vmem:[%s403] ss:$8 sm:$0x3]
    %s405 = scalar_lea.vmem %s3, 3
    %v406 = vld [vmem:[%s405] ss:$8 sm:$0x3]
    %s407 = scalar_lea.vmem %s3, 4
    %v408 = vld [vmem:[%s407] ss:$8 sm:$0x3]
    %s409 = scalar_lea.vmem %s3, 16
    %v410 = vld [vmem:[%s409] ss:$8 sm:$0x3]
    %s411 = scalar_lea.vmem %s409, 1
    %v412 = vld [vmem:[%s411] ss:$8 sm:$0x3]
    %s413 = scalar_lea.vmem %s409, 2
    %v414 = vld [vmem:[%s413] ss:$8 sm:$0x3]
    %s415 = scalar_lea.vmem %s409, 3
    %v416 = vld [vmem:[%s415] ss:$8 sm:$0x3]
    %s417 = scalar_lea.vmem %s409, 4
    %v418 = vld [vmem:[%s417] ss:$8 sm:$0x3]
    %v419 = vmax.f32 %v343, %v375
    %s420 = sld [smem:[#allocation5]]
    %v421 = vstv %s420
    %v422 = vadd.f32 %v419, %v421
    %v423 = vmax.f32 %v422, 0.0
    %v425 = vlaneseq
    %v426 = vshrl.u32 %v425, 7
    %v427 = vsub.s32 0, %v426
    %v428 = vrot.slane %v400, %v427
    %v429 = vlaneseq
    %v430 = vshrl.u32 %v429, 7
    %v431 = vsub.s32 1, %v430
    %v432 = vrot.slane %v400, %v431
    %v433 = vcombine.low %v428, %v432
    %v435 = vunpack.c.l.s4 1983009808
    %v436 = vunpack.c.0.s8 %v435
    %v437 = vlaneseq
    %v438 = vshrl.u32 %v437, 7
    %v439 = vsub.s32 %v436, %v438
    %v440 = vrot.slane %v433, %v439
    %v442 = vmul.f32 %v423, %v440
    %v444 = vlaneseq
    %v445 = vshrl.u32 %v444, 7
    %v446 = vsub.s32 0, %v445
    %v447 = vrot.slane %v410, %v446
    %v448 = vlaneseq
    %v449 = vshrl.u32 %v448, 7
    %v450 = vsub.s32 1, %v449
    %v451 = vrot.slane %v410, %v450
    %v452 = vcombine.low %v447, %v451
    %v454 = vunpack.c.l.s4 1983009808
    %v455 = vunpack.c.0.s8 %v454
    %v456 = vlaneseq
    %v457 = vshrl.u32 %v456, 7
    %v458 = vsub.s32 %v455, %v457
    %v459 = vrot.slane %v452, %v458
    %v461 = vmul.f32 %v423, %v459
    %v462 = vmax.f32 %v349, %v381
    %s463 = sld [smem:[#allocation5 + $0x1]]
    %v464 = vstv %s463
    %v465 = vadd.f32 %v462, %v464
    %v466 = vmax.f32 %v465, 0.0
    %v468 = vlaneseq
    %v469 = vshrl.u32 %v468, 7
    %v470 = vsub.s32 0, %v469
    %v471 = vrot.slane %v402, %v470
    %v472 = vlaneseq
    %v473 = vshrl.u32 %v472, 7
    %v474 = vsub.s32 1, %v473
    %v475 = vrot.slane %v402, %v474
    %v476 = vcombine.low %v471, %v475
    %v478 = vunpack.c.l.s4 1983009808
    %v479 = vunpack.c.0.s8 %v478
    %v480 = vlaneseq
    %v481 = vshrl.u32 %v480, 7
    %v482 = vsub.s32 %v479, %v481
    %v483 = vrot.slane %v476, %v482
    %v485 = vmul.f32 %v466, %v483
    %v486 = vadd.f32 %v442, %v485
    %v488 = vlaneseq
    %v489 = vshrl.u32 %v488, 7
    %v490 = vsub.s32 0, %v489
    %v491 = vrot.slane %v412, %v490
    %v492 = vlaneseq
    %v493 = vshrl.u32 %v492, 7
    %v494 = vsub.s32 1, %v493
    %v495 = vrot.slane %v412, %v494
    %v496 = vcombine.low %v491, %v495
    %v498 = vunpack.c.l.s4 1983009808
    %v499 = vunpack.c.0.s8 %v498
    %v500 = vlaneseq
    %v501 = vshrl.u32 %v500, 7
    %v502 = vsub.s32 %v499, %v501
    %v503 = vrot.slane %v496, %v502
    %v505 = vmul.f32 %v466, %v503
    %v506 = vadd.f32 %v461, %v505
    %v507 = vmax.f32 %v355, %v387
    %s508 = sld [smem:[#allocation5 + $0x2]]
    %v509 = vstv %s508
    %v510 = vadd.f32 %v507, %v509
    %v511 = vmax.f32 %v510, 0.0
    %v513 = vlaneseq
    %v514 = vshrl.u32 %v513, 7
    %v515 = vsub.s32 0, %v514
    %v516 = vrot.slane %v404, %v515
    %v517 = vlaneseq
    %v518 = vshrl.u32 %v517, 7
    %v519 = vsub.s32 1, %v518
    %v520 = vrot.slane %v404, %v519
    %v521 = vcombine.low %v516, %v520
    %v523 = vunpack.c.l.s4 1983009808
    %v524 = vunpack.c.0.s8 %v523
    %v525 = vlaneseq
    %v526 = vshrl.u32 %v525, 7
    %v527 = vsub.s32 %v524, %v526
    %v528 = vrot.slane %v521, %v527
    %v530 = vmul.f32 %v511, %v528
    %v531 = vadd.f32 %v486, %v530
    %v533 = vlaneseq
    %v534 = vshrl.u32 %v533, 7
    %v535 = vsub.s32 0, %v534
    %v536 = vrot.slane %v414, %v535
    %v537 = vlaneseq
    %v538 = vshrl.u32 %v537, 7
    %v539 = vsub.s32 1, %v538
    %v540 = vrot.slane %v414, %v539
    %v541 = vcombine.low %v536, %v540
    %v543 = vunpack.c.l.s4 1983009808
    %v544 = vunpack.c.0.s8 %v543
    %v545 = vlaneseq
    %v546 = vshrl.u32 %v545, 7
    %v547 = vsub.s32 %v544, %v546
    %v548 = vrot.slane %v541, %v547
    %v550 = vmul.f32 %v511, %v548
    %v551 = vadd.f32 %v506, %v550
    %v552 = vmax.f32 %v361, %v393
    %s553 = sld [smem:[#allocation5 + $0x3]]
    %v554 = vstv %s553
    %v555 = vadd.f32 %v552, %v554
    %v556 = vmax.f32 %v555, 0.0
    %v558 = vlaneseq
    %v559 = vshrl.u32 %v558, 7
    %v560 = vsub.s32 0, %v559
    %v561 = vrot.slane %v406, %v560
    %v562 = vlaneseq
    %v563 = vshrl.u32 %v562, 7
    %v564 = vsub.s32 1, %v563
    %v565 = vrot.slane %v406, %v564
    %v566 = vcombine.low %v561, %v565
    %v568 = vunpack.c.l.s4 1983009808
    %v569 = vunpack.c.0.s8 %v568
    %v570 = vlaneseq
    %v571 = vshrl.u32 %v570, 7
    %v572 = vsub.s32 %v569, %v571
    %v573 = vrot.slane %v566, %v572
    %v575 = vmul.f32 %v556, %v573
    %v576 = vadd.f32 %v531, %v575
    %v578 = vlaneseq
    %v579 = vshrl.u32 %v578, 7
    %v580 = vsub.s32 0, %v579
    %v581 = vrot.slane %v416, %v580
    %v582 = vlaneseq
    %v583 = vshrl.u32 %v582, 7
    %v584 = vsub.s32 1, %v583
    %v585 = vrot.slane %v416, %v584
    %v586 = vcombine.low %v581, %v585
    %v588 = vunpack.c.l.s4 1983009808
    %v589 = vunpack.c.0.s8 %v588
    %v590 = vlaneseq
    %v591 = vshrl.u32 %v590, 7
    %v592 = vsub.s32 %v589, %v591
    %v593 = vrot.slane %v586, %v592
    %v595 = vmul.f32 %v556, %v593
    %v596 = vadd.f32 %v551, %v595
    %v597 = vmax.f32 %v367, %v399
    %s598 = sld [smem:[#allocation5 + $0x4]]
    %v599 = vstv %s598
    %v600 = vadd.f32 %v597, %v599
    %v601 = vmax.f32 %v600, 0.0
    %v603 = vlaneseq
    %v604 = vshrl.u32 %v603, 7
    %v605 = vsub.s32 0, %v604
    %v606 = vrot.slane %v408, %v605
    %v607 = vlaneseq
    %v608 = vshrl.u32 %v607, 7
    %v609 = vsub.s32 1, %v608
    %v610 = vrot.slane %v408, %v609
    %v611 = vcombine.low %v606, %v610
    %v613 = vunpack.c.l.s4 1983009808
    %v614 = vunpack.c.0.s8 %v613
    %v615 = vlaneseq
    %v616 = vshrl.u32 %v615, 7
    %v617 = vsub.s32 %v614, %v616
    %v618 = vrot.slane %v611, %v617
    %v620 = vmul.f32 %v601, %v618
    %v621 = vadd.f32 %v576, %v620
    %v623 = vlaneseq
    %v624 = vshrl.u32 %v623, 7
    %v625 = vsub.s32 0, %v624
    %v626 = vrot.slane %v418, %v625
    %v627 = vlaneseq
    %v628 = vshrl.u32 %v627, 7
    %v629 = vsub.s32 1, %v628
    %v630 = vrot.slane %v418, %v629
    %v631 = vcombine.low %v626, %v630
    %v633 = vunpack.c.l.s4 1983009808
    %v634 = vunpack.c.0.s8 %v633
    %v635 = vlaneseq
    %v636 = vshrl.u32 %v635, 7
    %v637 = vsub.s32 %v634, %v636
    %v638 = vrot.slane %v631, %v637
    %v640 = vmul.f32 %v601, %v638
    %v641 = vadd.f32 %v596, %v640
    %v644 = vunpack.c.l.s4 1983009808
    %v645 = vunpack.c.0.s8 %v644
    %v646 = vlaneseq
    %v647 = vshrl.u32 %v646, 7
    %v648 = vsub.s32 %v645, %v647
    %v649 = vrot.slane %v621, %v648
    %v650 = vcombine.high %v649, %v649
    %vm653 = vcmask 1041408
    %v654 = vsel %vm653, %v649, 0.0
    %vm655 = vcmask 173056
    %v656 = vsel %vm655, %v650, 0.0
    %v657 = vadd.f32 %v654, %v656
    %658 = vadd.xlane.f32.xlu0 %v657
    %v659 = vpop.xlane.xlu0 %658
    %s660 = sld [smem:[#allocation7]]
    %v661 = vstv %s660
    %v662 = vadd.f32 %v659, %v661
    %v665 = vunpack.c.l.s4 1983009808
    %v666 = vunpack.c.0.s8 %v665
    %v667 = vlaneseq
    %v668 = vshrl.u32 %v667, 7
    %v669 = vsub.s32 %v666, %v668
    %v670 = vrot.slane %v641, %v669
    %v671 = vcombine.high %v670, %v670
    %v674 = vsel %vm653, %v670, 0.0
    %v675 = vsel %vm655, %v671, 0.0
    %v676 = vadd.f32 %v674, %v675
    %677 = vadd.xlane.f32.xlu0 %v676
    %v678 = vpop.xlane.xlu0 %677
    %s679 = sld [smem:[#allocation7 + $0x1]]
    %v680 = vstv %s679
    %v681 = vadd.f32 %v678, %v680
    %vm682 = vcmask 7168
    %v683 = vsel %vm682, %v662, %v681
    %vm684 = vcmask 9216
    %685 = vst.msk [vmem:[#allocation8] sm:$0x3] %vm684, %v683
    // Predicated region
    $region34: #{tpu_custom_call.1} parent=1 // pred_check
      _
    $region35: #{tpu_custom_call.1} parent=1 // pred_check_branch
      %687 = sbr.rel (0) target = $region37
    $region36: #{tpu_custom_call.1} parent=1 // pred_region
      %s689 = ssub.s32 32, 32
      %690 = vsyncadd [#allocation3], %s689
      %s692 = sshll.u32 [#allocation8], 4
      %s693 = int_to_ptr.vmem [resolvable:$true] %s692
      %695 = dma.vmem_to_hbm [thread:$0]  %s693, 32, %s5, [#allocation3]
    $region37: #{tpu_custom_call.1} parent=1 // pred_fallthru
      _
    // Predicated region
    $region38: #{tpu_custom_call.1} parent=1 // pred_check
      _
    $region39: #{tpu_custom_call.1} parent=1 // pred_check_branch
      %697 = sbr.rel (0) target = $region41
    $region40: #{tpu_custom_call.1} parent=1 // pred_region
      %698 = dma.done [#allocation3], 32
    $region41: #{tpu_custom_call.1} parent=1 // pred_fallthru
      _
    %699 = vsyncpa [#allocation3], 1
    %700 = vsyncpa [#allocation4], 1
    %701 = vsyncpa [#allocation6], 1

</llo_original>
